<compile_context>
chip_gen: v6e
topology: v6e:2x2x1
jax: 0.10.0
libtpu: 0.0.40
codegen_flags: <defaults>
</compile_context>

<pallas_src>
import functools
import math

import jax
import jax.numpy as jnp
from jax.experimental import pallas as pl
from jax.experimental.pallas import tpu as pltpu


# ----------------------------------------------------------------------------
# Relative-position bias (compute_bias): integer bucketing + embedding gather.
# This is a tiny one-time [S, S] preprocessing step with a data-dependent
# gather, so it is computed in plain JAX in the wrapper, not inside the kernel.
# ----------------------------------------------------------------------------
def t5_relative_position_bucket(relative_position, bidirectional=True,
                                num_buckets=32, max_distance=128):
    relative_buckets = jnp.zeros_like(relative_position)
    if bidirectional:
        num_buckets //= 2
        relative_buckets = relative_buckets + (
            (relative_position > 0).astype(jnp.int32) * num_buckets)
        relative_position = jnp.abs(relative_position)
    else:
        relative_position = -jnp.minimum(relative_position,
                                         jnp.zeros_like(relative_position))
    max_exact = num_buckets // 2
    is_small = relative_position < max_exact
    rel_if_large = max_exact + (
        jnp.log(relative_position.astype(jnp.float32) / max_exact)
        / math.log(max_distance / max_exact)
        * (num_buckets - max_exact)
    ).astype(jnp.int32)
    rel_if_large = jnp.minimum(rel_if_large, num_buckets - 1)
    relative_buckets = relative_buckets + jnp.where(is_small, relative_position,
                                                    rel_if_large)
    return relative_buckets


def t5_compute_position_bias(rel_attn_bias_weight, query_length, key_length,
                             bidirectional=True, num_buckets=32,
                             max_distance=128):
    """rel_attn_bias_weight: [num_buckets, n_heads] -> bias [n_heads, q, k]."""
    ctx_pos = jnp.arange(query_length, dtype=jnp.int32)[:, None]
    mem_pos = jnp.arange(key_length, dtype=jnp.int32)[None, :]
    rel_pos = mem_pos - ctx_pos
    buckets = t5_relative_position_bucket(rel_pos, bidirectional=bidirectional,
                                          num_buckets=num_buckets,
                                          max_distance=max_distance)
    values = rel_attn_bias_weight[buckets]          # [q, k, n_heads]
    return jnp.transpose(values, (2, 0, 1))         # [n_heads, q, k]


# ----------------------------------------------------------------------------
# Fused Pallas kernel: one batch element per grid step.
# ----------------------------------------------------------------------------
def _t5_self_attn_kernel(x_ref, ln_w_ref, wq_ref, wk_ref, wv_ref, wo_ref,
                         bias_ref, mask_ref, o_ref, *, n_heads, d_kv, eps):
    x = x_ref[0]                                           # [S, D]
    xf = x.astype(jnp.float32)

    # --- T5 RMS layer norm (f32 statistics, like the PyTorch module) --------
    var = jnp.mean(xf * xf, axis=-1, keepdims=True)
    normed = xf * jax.lax.rsqrt(var + eps)
    normed = (normed * ln_w_ref[...].astype(jnp.float32)).astype(x.dtype)

    # --- Q / K / V projections (MXU, f32 accumulation) ----------------------
    q = jnp.dot(normed, wq_ref[...], preferred_element_type=jnp.float32)
    k = jnp.dot(normed, wk_ref[...], preferred_element_type=jnp.float32)
    v = jnp.dot(normed, wv_ref[...], preferred_element_type=jnp.float32)

    mask = mask_ref[0].astype(jnp.float32)                 # [1, S] additive

    s_len, d_model = x.shape
    acc = jnp.zeros((s_len, d_model), jnp.float32)
    for h in range(n_heads):                               # static unroll
        lo = h * d_kv
        qh = q[:, lo:lo + d_kv]                            # [S, d_kv]
        kh = k[:, lo:lo + d_kv]
        vh = v[:, lo:lo + d_kv]
        # T5 attention: NO 1/sqrt(d_kv) scaling of the scores.
        s = jnp.dot(qh, kh.T, preferred_element_type=jnp.float32)     # [S, S]
        s = s + bias_ref[h].astype(jnp.float32) + mask
        m = jnp.max(s, axis=-1, keepdims=True)
        p = jnp.exp(s - m)
        p = p / jnp.sum(p, axis=-1, keepdims=True)         # exact f32 softmax
        # dropout(p): identity in eval mode.
        ctx = jnp.dot(p.astype(x.dtype), vh.astype(x.dtype),
                      preferred_element_type=jnp.float32)  # [S, d_kv]
        # Output projection folded per head (== concat + single matmul).
        acc = acc + jnp.dot(ctx.astype(x.dtype), wo_ref[lo:lo + d_kv, :],
                            preferred_element_type=jnp.float32)       # [S, D]

    # Residual add (dropout = identity in eval mode).
    o_ref[0] = (xf + acc).astype(o_ref.dtype)


def nash_t5_layer_self_attention(hidden_states, ln_weight, wq, wk, wv, wo,
                                 position_bias, attention_mask=None,
                                 *, eps=1e-6, vmem_limit_bytes=None):
    """Forward of NashT5LayerSelfAttention (inference path).

    hidden_states:  [B, S, d_model]
    ln_weight:      [d_model]                         (NashT5LayerNorm.weight)
    wq / wk / wv:   [inner_dim, d_model]              (PyTorch nn.Linear layout)
    wo:             [d_model, inner_dim]              (PyTorch nn.Linear layout)
    position_bias:  [n_heads, S, S]  additive relative-attention bias
    attention_mask: optional additive mask, broadcastable to [B, S]
                    (0 = keep, large negative = masked), as in T5's extended mask.
    """
    B, S, D = hidden_states.shape
    inner = wq.shape[0]
    n_heads = position_bias.shape[0]
    d_kv = inner // n_heads

    # One-time weight prepack (hoisted/fused by jit; do it at init in practice).
    wq_t = wq.T                       # [D, inner]
    wk_t = wk.T                       # [D, inner]
    wv_t = wv.T                       # [D, inner]
    wo_t = wo.T                       # [inner, D]
    ln_w2d = ln_weight.reshape(1, D)
    bias = position_bias.astype(jnp.float32)
    if attention_mask is None:
        mask = jnp.zeros((B, 1, S), jnp.float32)
    else:
        mask = jnp.broadcast_to(
            jnp.asarray(attention_mask, jnp.float32).reshape(B, -1), (B, S)
        ).reshape(B, 1, S)

    itemsize = hidden_states.dtype.itemsize
    flops = int(3 * 2 * B * S * D * inner             # QKV projections
                + 2 * 2 * B * n_heads * S * S * d_kv  # scores + context
                + 2 * B * S * inner * D)              # output projection
    transcendentals = int(B * n_heads * S * S + B * S)
    bytes_accessed = int(2 * B * S * D * itemsize     # x in + out
                         + 4 * D * inner * itemsize   # the four weight matrices
                         + n_heads * S * S * 4        # position bias
                         + B * S * 4 + D * itemsize)  # mask + ln weight

    kernel = functools.partial(_t5_self_attn_kernel,
                               n_heads=n_heads, d_kv=d_kv, eps=eps)

    out = pl.pallas_call(
        kernel,
        out_shape=jax.ShapeDtypeStruct((B, S, D), hidden_states.dtype),
        grid_spec=pltpu.PrefetchScalarGridSpec(
            num_scalar_prefetch=0,
            grid=(B,),
            in_specs=[
                pl.BlockSpec((1, S, D), lambda b: (b, 0, 0)),        # x
                pl.BlockSpec((1, D), lambda b: (0, 0)),              # ln weight
                pl.BlockSpec((D, inner), lambda b: (0, 0)),          # Wq^T (resident)
                pl.BlockSpec((D, inner), lambda b: (0, 0)),          # Wk^T (resident)
                pl.BlockSpec((D, inner), lambda b: (0, 0)),          # Wv^T (resident)
                pl.BlockSpec((inner, D), lambda b: (0, 0)),          # Wo^T (resident)
                pl.BlockSpec((n_heads, S, S), lambda b: (0, 0, 0)),  # position bias
                pl.BlockSpec((1, 1, S), lambda b: (b, 0, 0)),        # additive mask
            ],
            out_specs=pl.BlockSpec((1, S, D), lambda b: (b, 0, 0)),
        ),
        compiler_params=pltpu.CompilerParams(
            dimension_semantics=("parallel",),
            # Raise per chip for realistic d_model / long S (e.g. 64-96 MiB on
            # v5e/v6e, <= 48 MiB on v7x). None keeps the compiler default,
            # which is ample for the small demo shapes below.
            vmem_limit_bytes=vmem_limit_bytes,
        ),
        cost_estimate=pl.CostEstimate(flops=flops,
                                      transcendentals=transcendentals,
                                      bytes_accessed=bytes_accessed),
    )(hidden_states, ln_w2d, wq_t, wk_t, wv_t, wo_t, bias, mask)
    return out


# ----------------------------------------------------------------------------
# Pure-JAX reference (mirrors the PyTorch module's eval-mode math).
# ----------------------------------------------------------------------------
def _reference(hidden_states, ln_weight, wq, wk, wv, wo, position_bias,
               attention_mask, n_heads, d_kv, eps=1e-6):
    B, S, D = hidden_states.shape
    xf = hidden_states.astype(jnp.float32)
    var = jnp.mean(xf * xf, axis=-1, keepdims=True)
    normed = xf * jax.lax.rsqrt(var + eps) * ln_weight.astype(jnp.float32)

    def shape_heads(w):
        y = normed @ w.T.astype(jnp.float32)                   # [B, S, inner]
        return y.reshape(B, S, n_heads, d_kv).transpose(0, 2, 1, 3)

    qh, kh, vh = shape_heads(wq), shape_heads(wk), shape_heads(wv)
    scores = jnp.einsum('bhqd,bhkd->bhqk', qh, kh)
    scores = scores + position_bias[None].astype(jnp.float32)
    if attention_mask is not None:
        scores = scores + jnp.asarray(attention_mask, jnp.float32).reshape(B, 1, 1, S)
    attn = jax.nn.softmax(scores, axis=-1)
    ctx = jnp.einsum('bhqk,bhkd->bhqd', attn, vh)
    ctx = ctx.transpose(0, 2, 1, 3).reshape(B, S, n_heads * d_kv)
    att_out = ctx @ wo.T.astype(jnp.float32)
    return (xf + att_out).astype(hidden_states.dtype)


if __name__ == "__main__":
    # Small config: batch=2, seq=8, d_model=32, n_heads=4, d_kv=8 (inner=32).
    B, S = 2, 8
    d_model, n_heads, d_kv = 32, 4, 8
    inner = n_heads * d_kv
    num_buckets = 32
    eps = 1e-6

    key = jax.random.PRNGKey(0)
    k_x, k_q, k_k, k_v, k_o, k_b, k_ln = jax.random.split(key, 7)

    hidden_states = jax.random.normal(k_x, (B, S, d_model), dtype=jnp.float32)
    ln_weight = 1.0 + 0.1 * jax.random.normal(k_ln, (d_model,), dtype=jnp.float32)
    wq = jax.random.normal(k_q, (inner, d_model), jnp.float32) * (1.0 / math.sqrt(d_model))
    wk = jax.random.normal(k_k, (inner, d_model), jnp.float32) * (1.0 / math.sqrt(d_model))
    wv = jax.random.normal(k_v, (inner, d_model), jnp.float32) * (1.0 / math.sqrt(d_model))
    wo = jax.random.normal(k_o, (d_model, inner), jnp.float32) * (1.0 / math.sqrt(inner))
    rel_bias_table = jax.random.normal(k_b, (num_buckets, n_heads), jnp.float32) * 0.1

    # Encoder self-attention: bidirectional relative-position bias, no padding mask.
    position_bias = t5_compute_position_bias(rel_bias_table, S, S,
                                             bidirectional=True,
                                             num_buckets=num_buckets)
    attention_mask = None

    fwd = jax.jit(functools.partial(nash_t5_layer_self_attention, eps=eps))
    out = fwd(hidden_states, ln_weight, wq, wk, wv, wo, position_bias, attention_mask)
    out = jax.block_until_ready(out)

    ref = _reference(hidden_states, ln_weight, wq, wk, wv, wo, position_bias,
                     attention_mask, n_heads, d_kv, eps)
    assert out.shape == (B, S, d_model)
    assert jnp.allclose(out, ref, atol=2e-4, rtol=2e-4), \
        float(jnp.max(jnp.abs(out - ref)))

    print("KERNEL_OK")
</pallas_src>

<mosaic_0001>
module attributes {stable_mosaic.version = 11 : i64} {
  func.func @_t5_self_attn_kernel(%arg0: i32, %arg1: memref<1x8x32xf32, #tpu.memory_space<vmem>>, %arg2: memref<1x32xf32, #tpu.memory_space<vmem>>, %arg3: memref<32x32xf32, #tpu.memory_space<vmem>>, %arg4: memref<32x32xf32, #tpu.memory_space<vmem>>, %arg5: memref<32x32xf32, #tpu.memory_space<vmem>>, %arg6: memref<32x32xf32, #tpu.memory_space<vmem>>, %arg7: memref<4x8x8xf32, #tpu.memory_space<vmem>>, %arg8: memref<1x1x8xf32, #tpu.memory_space<vmem>>, %arg9: memref<1x8x32xf32, #tpu.memory_space<vmem>>) attributes {dimension_semantics = [#tpu.dimension_semantics<parallel>], iteration_bounds = array<i64: 2>, scalar_prefetch = 0 : i64, scratch_operands = 0 : i64, tpu.core_type = #tpu.core_type<tc>, window_params = [{transform_indices = @transform_0, window_bounds = array<i64: 1, 8, 32>}, {pipeline_mode = #tpu.pipeline_mode<synchronous>, transform_indices = @transform_1, window_bounds = array<i64: 1, 32>}, {pipeline_mode = #tpu.pipeline_mode<synchronous>, transform_indices = @transform_2, window_bounds = array<i64: 32, 32>}, {pipeline_mode = #tpu.pipeline_mode<synchronous>, transform_indices = @transform_3, window_bounds = array<i64: 32, 32>}, {pipeline_mode = #tpu.pipeline_mode<synchronous>, transform_indices = @transform_4, window_bounds = array<i64: 32, 32>}, {pipeline_mode = #tpu.pipeline_mode<synchronous>, transform_indices = @transform_5, window_bounds = array<i64: 32, 32>}, {pipeline_mode = #tpu.pipeline_mode<synchronous>, transform_indices = @transform_6, window_bounds = array<i64: 4, 8, 8>}, {transform_indices = @transform_7, window_bounds = array<i64: 1, 1, 8>}, {transform_indices = @transform_8, window_bounds = array<i64: 1, 8, 32>}]} {
    %c0 = arith.constant 0 : index
    %c0_0 = arith.constant 0 : index
    %c0_1 = arith.constant 0 : index
    %0 = vector.load %arg1[%c0, %c0_0, %c0_1] : memref<1x8x32xf32, #tpu.memory_space<vmem>>, vector<1x8x32xf32>
    %1 = vector.shape_cast %0 : vector<1x8x32xf32> to vector<8x32xf32>
    %2 = arith.mulf %1, %1 : vector<8x32xf32>
    %cst = arith.constant dense<0.000000e+00> : vector<8xf32>
    %3 = vector.multi_reduction <add>, %2, %cst [1] : vector<8x32xf32> to vector<8xf32>
    %4 = vector.shape_cast %3 : vector<8xf32> to vector<8x1xf32>
    %cst_2 = arith.constant 3.200000e+01 : f32
    %5 = vector.broadcast %cst_2 : f32 to vector<8x1xf32>
    %6 = arith.divf %4, %5 : vector<8x1xf32>
    %cst_3 = arith.constant 9.99999997E-7 : f32
    %7 = vector.broadcast %cst_3 : f32 to vector<8x1xf32>
    %8 = arith.addf %6, %7 : vector<8x1xf32>
    %9 = math.rsqrt %8 : vector<8x1xf32>
    %10 = vector.broadcast %9 : vector<8x1xf32> to vector<8x32xf32>
    %11 = arith.mulf %1, %10 : vector<8x32xf32>
    %c0_4 = arith.constant 0 : index
    %c0_5 = arith.constant 0 : index
    %12 = vector.load %arg2[%c0_4, %c0_5] : memref<1x32xf32, #tpu.memory_space<vmem>>, vector<1x32xf32>
    %13 = vector.broadcast %12 : vector<1x32xf32> to vector<8x32xf32>
    %14 = arith.mulf %11, %13 : vector<8x32xf32>
    %c0_6 = arith.constant 0 : index
    %c0_7 = arith.constant 0 : index
    %15 = vector.load %arg3[%c0_6, %c0_7] : memref<32x32xf32, #tpu.memory_space<vmem>>, vector<32x32xf32>
    %cst_8 = arith.constant dense<0.000000e+00> : vector<8x32xf32>
    %16 = tpu.matmul %14, %15, %cst_8 {dimension_numbers = #tpu.dot_dimension_numbers<[1], [0], [0], [1], [0, 0, 1, 1], [], []>} : vector<8x32xf32>, vector<32x32xf32>, vector<8x32xf32> -> vector<8x32xf32>
    %c0_9 = arith.constant 0 : index
    %c0_10 = arith.constant 0 : index
    %17 = vector.load %arg4[%c0_9, %c0_10] : memref<32x32xf32, #tpu.memory_space<vmem>>, vector<32x32xf32>
    %cst_11 = arith.constant dense<0.000000e+00> : vector<8x32xf32>
    %18 = tpu.matmul %14, %17, %cst_11 {dimension_numbers = #tpu.dot_dimension_numbers<[1], [0], [0], [1], [0, 0, 1, 1], [], []>} : vector<8x32xf32>, vector<32x32xf32>, vector<8x32xf32> -> vector<8x32xf32>
    %c0_12 = arith.constant 0 : index
    %c0_13 = arith.constant 0 : index
    %19 = vector.load %arg5[%c0_12, %c0_13] : memref<32x32xf32, #tpu.memory_space<vmem>>, vector<32x32xf32>
    %cst_14 = arith.constant dense<0.000000e+00> : vector<8x32xf32>
    %20 = tpu.matmul %14, %19, %cst_14 {dimension_numbers = #tpu.dot_dimension_numbers<[1], [0], [0], [1], [0, 0, 1, 1], [], []>} : vector<8x32xf32>, vector<32x32xf32>, vector<8x32xf32> -> vector<8x32xf32>
    %c0_15 = arith.constant 0 : index
    %c0_16 = arith.constant 0 : index
    %c0_17 = arith.constant 0 : index
    %21 = vector.load %arg8[%c0_15, %c0_16, %c0_17] : memref<1x1x8xf32, #tpu.memory_space<vmem>>, vector<1x1x8xf32>
    %22 = vector.shape_cast %21 : vector<1x1x8xf32> to vector<1x8xf32>
    %cst_18 = arith.constant 0.000000e+00 : f32
    %23 = vector.broadcast %cst_18 : f32 to vector<8x32xf32>
    %24 = vector.extract_strided_slice %16 {offsets = [0, 0], sizes = [8, 8], strides = [1, 1]} : vector<8x32xf32> to vector<8x8xf32>
    %25 = vector.extract_strided_slice %18 {offsets = [0, 0], sizes = [8, 8], strides = [1, 1]} : vector<8x32xf32> to vector<8x8xf32>
    %26 = vector.extract_strided_slice %20 {offsets = [0, 0], sizes = [8, 8], strides = [1, 1]} : vector<8x32xf32> to vector<8x8xf32>
    %27 = tpu.transpose %25, [1, 0] : vector<8x8xf32> -> vector<8x8xf32>
    %cst_19 = arith.constant dense<0.000000e+00> : vector<8x8xf32>
    %28 = tpu.matmul %24, %27, %cst_19 {dimension_numbers = #tpu.dot_dimension_numbers<[1], [0], [0], [1], [0, 0, 1, 1], [], []>} : vector<8x8xf32>, vector<8x8xf32>, vector<8x8xf32> -> vector<8x8xf32>
    %c0_20 = arith.constant 0 : index
    %c0_21 = arith.constant 0 : index
    %c0_22 = arith.constant 0 : index
    %29 = vector.load %arg7[%c0_20, %c0_21, %c0_22] : memref<4x8x8xf32, #tpu.memory_space<vmem>>, vector<1x8x8xf32>
    %30 = vector.shape_cast %29 : vector<1x8x8xf32> to vector<8x8xf32>
    %31 = arith.addf %28, %30 : vector<8x8xf32>
    %32 = vector.broadcast %22 : vector<1x8xf32> to vector<8x8xf32>
    %33 = arith.addf %31, %32 : vector<8x8xf32>
    %cst_23 = arith.constant dense<0xFF800000> : vector<8xf32>
    %34 = vector.multi_reduction <maximumf>, %33, %cst_23 [1] : vector<8x8xf32> to vector<8xf32>
    %35 = vector.shape_cast %34 : vector<8xf32> to vector<8x1xf32>
    %36 = vector.broadcast %35 : vector<8x1xf32> to vector<8x8xf32>
    %37 = arith.subf %33, %36 : vector<8x8xf32>
    %38 = math.exp %37 : vector<8x8xf32>
    %cst_24 = arith.constant dense<0.000000e+00> : vector<8xf32>
    %39 = vector.multi_reduction <add>, %38, %cst_24 [1] : vector<8x8xf32> to vector<8xf32>
    %40 = vector.shape_cast %39 : vector<8xf32> to vector<8x1xf32>
    %41 = vector.broadcast %40 : vector<8x1xf32> to vector<8x8xf32>
    %42 = arith.divf %38, %41 : vector<8x8xf32>
    %cst_25 = arith.constant dense<0.000000e+00> : vector<8x8xf32>
    %43 = tpu.matmul %42, %26, %cst_25 {dimension_numbers = #tpu.dot_dimension_numbers<[1], [0], [0], [1], [0, 0, 1, 1], [], []>} : vector<8x8xf32>, vector<8x8xf32>, vector<8x8xf32> -> vector<8x8xf32>
    %c0_26 = arith.constant 0 : index
    %c0_27 = arith.constant 0 : index
    %44 = vector.load %arg6[%c0_26, %c0_27] : memref<32x32xf32, #tpu.memory_space<vmem>>, vector<8x32xf32>
    %cst_28 = arith.constant dense<0.000000e+00> : vector<8x32xf32>
    %45 = tpu.matmul %43, %44, %cst_28 {dimension_numbers = #tpu.dot_dimension_numbers<[1], [0], [0], [1], [0, 0, 1, 1], [], []>} : vector<8x8xf32>, vector<8x32xf32>, vector<8x32xf32> -> vector<8x32xf32>
    %46 = arith.addf %23, %45 : vector<8x32xf32>
    %47 = vector.extract_strided_slice %16 {offsets = [0, 8], sizes = [8, 8], strides = [1, 1]} : vector<8x32xf32> to vector<8x8xf32>
    %48 = vector.extract_strided_slice %18 {offsets = [0, 8], sizes = [8, 8], strides = [1, 1]} : vector<8x32xf32> to vector<8x8xf32>
    %49 = vector.extract_strided_slice %20 {offsets = [0, 8], sizes = [8, 8], strides = [1, 1]} : vector<8x32xf32> to vector<8x8xf32>
    %50 = tpu.transpose %48, [1, 0] : vector<8x8xf32> -> vector<8x8xf32>
    %cst_29 = arith.constant dense<0.000000e+00> : vector<8x8xf32>
    %51 = tpu.matmul %47, %50, %cst_29 {dimension_numbers = #tpu.dot_dimension_numbers<[1], [0], [0], [1], [0, 0, 1, 1], [], []>} : vector<8x8xf32>, vector<8x8xf32>, vector<8x8xf32> -> vector<8x8xf32>
    %c1 = arith.constant 1 : index
    %c0_30 = arith.constant 0 : index
    %c0_31 = arith.constant 0 : index
    %52 = vector.load %arg7[%c1, %c0_30, %c0_31] : memref<4x8x8xf32, #tpu.memory_space<vmem>>, vector<1x8x8xf32>
    %53 = vector.shape_cast %52 : vector<1x8x8xf32> to vector<8x8xf32>
    %54 = arith.addf %51, %53 : vector<8x8xf32>
    %55 = vector.broadcast %22 : vector<1x8xf32> to vector<8x8xf32>
    %56 = arith.addf %54, %55 : vector<8x8xf32>
    %cst_32 = arith.constant dense<0xFF800000> : vector<8xf32>
    %57 = vector.multi_reduction <maximumf>, %56, %cst_32 [1] : vector<8x8xf32> to vector<8xf32>
    %58 = vector.shape_cast %57 : vector<8xf32> to vector<8x1xf32>
    %59 = vector.broadcast %58 : vector<8x1xf32> to vector<8x8xf32>
    %60 = arith.subf %56, %59 : vector<8x8xf32>
    %61 = math.exp %60 : vector<8x8xf32>
    %cst_33 = arith.constant dense<0.000000e+00> : vector<8xf32>
    %62 = vector.multi_reduction <add>, %61, %cst_33 [1] : vector<8x8xf32> to vector<8xf32>
    %63 = vector.shape_cast %62 : vector<8xf32> to vector<8x1xf32>
    %64 = vector.broadcast %63 : vector<8x1xf32> to vector<8x8xf32>
    %65 = arith.divf %61, %64 : vector<8x8xf32>
    %cst_34 = arith.constant dense<0.000000e+00> : vector<8x8xf32>
    %66 = tpu.matmul %65, %49, %cst_34 {dimension_numbers = #tpu.dot_dimension_numbers<[1], [0], [0], [1], [0, 0, 1, 1], [], []>} : vector<8x8xf32>, vector<8x8xf32>, vector<8x8xf32> -> vector<8x8xf32>
    %c8 = arith.constant 8 : index
    %c0_35 = arith.constant 0 : index
    %67 = vector.load %arg6[%c8, %c0_35] : memref<32x32xf32, #tpu.memory_space<vmem>>, vector<8x32xf32>
    %cst_36 = arith.constant dense<0.000000e+00> : vector<8x32xf32>
    %68 = tpu.matmul %66, %67, %cst_36 {dimension_numbers = #tpu.dot_dimension_numbers<[1], [0], [0], [1], [0, 0, 1, 1], [], []>} : vector<8x8xf32>, vector<8x32xf32>, vector<8x32xf32> -> vector<8x32xf32>
    %69 = arith.addf %46, %68 : vector<8x32xf32>
    %70 = vector.extract_strided_slice %16 {offsets = [0, 16], sizes = [8, 8], strides = [1, 1]} : vector<8x32xf32> to vector<8x8xf32>
    %71 = vector.extract_strided_slice %18 {offsets = [0, 16], sizes = [8, 8], strides = [1, 1]} : vector<8x32xf32> to vector<8x8xf32>
    %72 = vector.extract_strided_slice %20 {offsets = [0, 16], sizes = [8, 8], strides = [1, 1]} : vector<8x32xf32> to vector<8x8xf32>
    %73 = tpu.transpose %71, [1, 0] : vector<8x8xf32> -> vector<8x8xf32>
    %cst_37 = arith.constant dense<0.000000e+00> : vector<8x8xf32>
    %74 = tpu.matmul %70, %73, %cst_37 {dimension_numbers = #tpu.dot_dimension_numbers<[1], [0], [0], [1], [0, 0, 1, 1], [], []>} : vector<8x8xf32>, vector<8x8xf32>, vector<8x8xf32> -> vector<8x8xf32>
    %c2 = arith.constant 2 : index
    %c0_38 = arith.constant 0 : index
    %c0_39 = arith.constant 0 : index
    %75 = vector.load %arg7[%c2, %c0_38, %c0_39] : memref<4x8x8xf32, #tpu.memory_space<vmem>>, vector<1x8x8xf32>
    %76 = vector.shape_cast %75 : vector<1x8x8xf32> to vector<8x8xf32>
    %77 = arith.addf %74, %76 : vector<8x8xf32>
    %78 = vector.broadcast %22 : vector<1x8xf32> to vector<8x8xf32>
    %79 = arith.addf %77, %78 : vector<8x8xf32>
    %cst_40 = arith.constant dense<0xFF800000> : vector<8xf32>
    %80 = vector.multi_reduction <maximumf>, %79, %cst_40 [1] : vector<8x8xf32> to vector<8xf32>
    %81 = vector.shape_cast %80 : vector<8xf32> to vector<8x1xf32>
    %82 = vector.broadcast %81 : vector<8x1xf32> to vector<8x8xf32>
    %83 = arith.subf %79, %82 : vector<8x8xf32>
    %84 = math.exp %83 : vector<8x8xf32>
    %cst_41 = arith.constant dense<0.000000e+00> : vector<8xf32>
    %85 = vector.multi_reduction <add>, %84, %cst_41 [1] : vector<8x8xf32> to vector<8xf32>
    %86 = vector.shape_cast %85 : vector<8xf32> to vector<8x1xf32>
    %87 = vector.broadcast %86 : vector<8x1xf32> to vector<8x8xf32>
    %88 = arith.divf %84, %87 : vector<8x8xf32>
    %cst_42 = arith.constant dense<0.000000e+00> : vector<8x8xf32>
    %89 = tpu.matmul %88, %72, %cst_42 {dimension_numbers = #tpu.dot_dimension_numbers<[1], [0], [0], [1], [0, 0, 1, 1], [], []>} : vector<8x8xf32>, vector<8x8xf32>, vector<8x8xf32> -> vector<8x8xf32>
    %c16 = arith.constant 16 : index
    %c0_43 = arith.constant 0 : index
    %90 = vector.load %arg6[%c16, %c0_43] : memref<32x32xf32, #tpu.memory_space<vmem>>, vector<8x32xf32>
    %cst_44 = arith.constant dense<0.000000e+00> : vector<8x32xf32>
    %91 = tpu.matmul %89, %90, %cst_44 {dimension_numbers = #tpu.dot_dimension_numbers<[1], [0], [0], [1], [0, 0, 1, 1], [], []>} : vector<8x8xf32>, vector<8x32xf32>, vector<8x32xf32> -> vector<8x32xf32>
    %92 = arith.addf %69, %91 : vector<8x32xf32>
    %93 = vector.extract_strided_slice %16 {offsets = [0, 24], sizes = [8, 8], strides = [1, 1]} : vector<8x32xf32> to vector<8x8xf32>
    %94 = vector.extract_strided_slice %18 {offsets = [0, 24], sizes = [8, 8], strides = [1, 1]} : vector<8x32xf32> to vector<8x8xf32>
    %95 = vector.extract_strided_slice %20 {offsets = [0, 24], sizes = [8, 8], strides = [1, 1]} : vector<8x32xf32> to vector<8x8xf32>
    %96 = tpu.transpose %94, [1, 0] : vector<8x8xf32> -> vector<8x8xf32>
    %cst_45 = arith.constant dense<0.000000e+00> : vector<8x8xf32>
    %97 = tpu.matmul %93, %96, %cst_45 {dimension_numbers = #tpu.dot_dimension_numbers<[1], [0], [0], [1], [0, 0, 1, 1], [], []>} : vector<8x8xf32>, vector<8x8xf32>, vector<8x8xf32> -> vector<8x8xf32>
    %c3 = arith.constant 3 : index
    %c0_46 = arith.constant 0 : index
    %c0_47 = arith.constant 0 : index
    %98 = vector.load %arg7[%c3, %c0_46, %c0_47] : memref<4x8x8xf32, #tpu.memory_space<vmem>>, vector<1x8x8xf32>
    %99 = vector.shape_cast %98 : vector<1x8x8xf32> to vector<8x8xf32>
    %100 = arith.addf %97, %99 : vector<8x8xf32>
    %101 = vector.broadcast %22 : vector<1x8xf32> to vector<8x8xf32>
    %102 = arith.addf %100, %101 : vector<8x8xf32>
    %cst_48 = arith.constant dense<0xFF800000> : vector<8xf32>
    %103 = vector.multi_reduction <maximumf>, %102, %cst_48 [1] : vector<8x8xf32> to vector<8xf32>
    %104 = vector.shape_cast %103 : vector<8xf32> to vector<8x1xf32>
    %105 = vector.broadcast %104 : vector<8x1xf32> to vector<8x8xf32>
    %106 = arith.subf %102, %105 : vector<8x8xf32>
    %107 = math.exp %106 : vector<8x8xf32>
    %cst_49 = arith.constant dense<0.000000e+00> : vector<8xf32>
    %108 = vector.multi_reduction <add>, %107, %cst_49 [1] : vector<8x8xf32> to vector<8xf32>
    %109 = vector.shape_cast %108 : vector<8xf32> to vector<8x1xf32>
    %110 = vector.broadcast %109 : vector<8x1xf32> to vector<8x8xf32>
    %111 = arith.divf %107, %110 : vector<8x8xf32>
    %cst_50 = arith.constant dense<0.000000e+00> : vector<8x8xf32>
    %112 = tpu.matmul %111, %95, %cst_50 {dimension_numbers = #tpu.dot_dimension_numbers<[1], [0], [0], [1], [0, 0, 1, 1], [], []>} : vector<8x8xf32>, vector<8x8xf32>, vector<8x8xf32> -> vector<8x8xf32>
    %c24 = arith.constant 24 : index
    %c0_51 = arith.constant 0 : index
    %113 = vector.load %arg6[%c24, %c0_51] : memref<32x32xf32, #tpu.memory_space<vmem>>, vector<8x32xf32>
    %cst_52 = arith.constant dense<0.000000e+00> : vector<8x32xf32>
    %114 = tpu.matmul %112, %113, %cst_52 {dimension_numbers = #tpu.dot_dimension_numbers<[1], [0], [0], [1], [0, 0, 1, 1], [], []>} : vector<8x8xf32>, vector<8x32xf32>, vector<8x32xf32> -> vector<8x32xf32>
    %115 = arith.addf %92, %114 : vector<8x32xf32>
    %116 = arith.addf %1, %115 : vector<8x32xf32>
    %c0_53 = arith.constant 0 : index
    %c0_54 = arith.constant 0 : index
    %c0_55 = arith.constant 0 : index
    %117 = vector.load %arg9[%c0_53, %c0_54, %c0_55] : memref<1x8x32xf32, #tpu.memory_space<vmem>>, vector<1x8x32xf32>
    %118 = vector.shape_cast %117 : vector<1x8x32xf32> to vector<8x32xf32>
    %119 = vector.shape_cast %116 : vector<8x32xf32> to vector<1x8x32xf32>
    tpu.vector_store %arg9[%c0_53, %c0_54, %c0_55], %119 {strides = array<i32>} : memref<1x8x32xf32, #tpu.memory_space<vmem>>, vector<1x8x32xf32>,
    return
  }
  func.func @transform_0(%arg0: i32) -> (i32, i32, i32) {
    %c0_i32 = arith.constant 0 : i32
    %c0_i32_0 = arith.constant 0 : i32
    %c0_i32_1 = arith.constant 0 : i32
    return %arg0, %c0_i32, %c0_i32_0 : i32, i32, i32
  }
  func.func @transform_1(%arg0: i32) -> (i32, i32) {
    %c0_i32 = arith.constant 0 : i32
    %c0_i32_0 = arith.constant 0 : i32
    %c0_i32_1 = arith.constant 0 : i32
    return %c0_i32, %c0_i32_0 : i32, i32
  }
  func.func @transform_2(%arg0: i32) -> (i32, i32) {
    %c0_i32 = arith.constant 0 : i32
    %c0_i32_0 = arith.constant 0 : i32
    %c0_i32_1 = arith.constant 0 : i32
    return %c0_i32, %c0_i32_0 : i32, i32
  }
  func.func @transform_3(%arg0: i32) -> (i32, i32) {
    %c0_i32 = arith.constant 0 : i32
    %c0_i32_0 = arith.constant 0 : i32
    %c0_i32_1 = arith.constant 0 : i32
    return %c0_i32, %c0_i32_0 : i32, i32
  }
  func.func @transform_4(%arg0: i32) -> (i32, i32) {
    %c0_i32 = arith.constant 0 : i32
    %c0_i32_0 = arith.constant 0 : i32
    %c0_i32_1 = arith.constant 0 : i32
    return %c0_i32, %c0_i32_0 : i32, i32
  }
  func.func @transform_5(%arg0: i32) -> (i32, i32) {
    %c0_i32 = arith.constant 0 : i32
    %c0_i32_0 = arith.constant 0 : i32
    %c0_i32_1 = arith.constant 0 : i32
    return %c0_i32, %c0_i32_0 : i32, i32
  }
  func.func @transform_6(%arg0: i32) -> (i32, i32, i32) {
    %c0_i32 = arith.constant 0 : i32
    %c0_i32_0 = arith.constant 0 : i32
    %c0_i32_1 = arith.constant 0 : i32
    %c0_i32_2 = arith.constant 0 : i32
    return %c0_i32, %c0_i32_0, %c0_i32_1 : i32, i32, i32
  }
  func.func @transform_7(%arg0: i32) -> (i32, i32, i32) {
    %c0_i32 = arith.constant 0 : i32
    %c0_i32_0 = arith.constant 0 : i32
    %c0_i32_1 = arith.constant 0 : i32
    return %arg0, %c0_i32, %c0_i32_0 : i32, i32, i32
  }
  func.func @transform_8(%arg0: i32) -> (i32, i32, i32) {
    %c0_i32 = arith.constant 0 : i32
    %c0_i32_0 = arith.constant 0 : i32
    %c0_i32_1 = arith.constant 0 : i32
    return %arg0, %c0_i32, %c0_i32_0 : i32, i32, i32
  }
}

</mosaic_0001>

<llo_original>
// kernel: nash_t5_layer_self_attention.1
$region0: #{nash_t5_layer_self_attention.1}
  #allocation0 [shape = 'u32[]', space=smem, size = 0x4, offset = 0x4, fixed_abs, tag = 'smem constant byte address 0x4 - core index']
  #allocation1 [shape = 'u32[144,128]{1,0:T(1,128)}', space=vmem, size = 0x12000, scoped, tag = 'internal scratch']
  %s0 = inlined_call_operand.vmem [shape: f32[2,8,32], index: 0, kind: input, shape index: {}]
  %s1 = inlined_call_operand.vmem [shape: f32[1,32], index: 1, kind: input, shape index: {}]
  %s2 = inlined_call_operand.vmem [shape: f32[32,32], index: 2, kind: input, shape index: {}]
  %s3 = inlined_call_operand.vmem [shape: f32[32,32], index: 3, kind: input, shape index: {}]
  %s4 = inlined_call_operand.vmem [shape: f32[32,32], index: 4, kind: input, shape index: {}]
  %s5 = inlined_call_operand.vmem [shape: f32[32,32], index: 5, kind: input, shape index: {}]
  %s6 = inlined_call_operand.vmem [shape: f32[4,8,8], index: 6, kind: input, shape index: {}]
  %s7 = inlined_call_operand.vmem [shape: f32[2,1,8], index: 7, kind: input, shape index: {}]
  %s8 = inlined_call_operand.hbm [shape: f32[2,8,32], index: 8, kind: output, shape index: {}]
  %s9 = sld [smem:[#allocation0]]
  $region65: #{nash_t5_layer_self_attention.1} parent=0
    _
  %s11 = ssub.s32 1, %s9
  %s12 = scalar_select 0, %s11, %s9
  $region1: #{nash_t5_layer_self_attention.1} parent=0
    #allocation2 [shape = 'u8[8192]{0}', space=vmem, size = 0x2000, scoped, tag = 'output window, operand 0']
    #allocation3 [shape = 's32[2]{0}', space=sflag, size = 0x8, scoped, tag = 'scoped memory for nash_t5_layer_self_attention.1']
    %13 = vsyncpa [#allocation3], 0
    %s14 = scalar_lea.sflag [#allocation3], 1
    %15 = vsyncpa %s14, 0
    loop: start=0, step=1, limit=4
    $region2: #{nash_t5_layer_self_attention.1} parent=1 // loop_pre_header
      _
    $region3: #{nash_t5_layer_self_attention.1} parent=1 // loop_header
      %s17 = sphi 0, %s21
      %p18 = scmp.ge.s32.totalorder %s17, 4
      %s27 = sphi 0, %s29
      %s30 = sphi 0, %s27
      %s31 = sphi 0, %s30
      %s47 = sphi 0, %s31
      %s51 = sphi 0, %s51
      %s53 = sphi 0, %s51
      %s54 = sphi 0, %s53
      %s68 = sphi 0, %s54
      %s72 = sphi 0, %s72
      %s74 = sphi 0, %s72
      %s75 = sphi 0, %s74
      %s89 = sphi 0, %s75
      %s93 = sphi 0, %s93
      %s95 = sphi 0, %s93
      %s96 = sphi 0, %s95
      %s110 = sphi 0, %s96
      %s114 = sphi 0, %s114
      %s116 = sphi 0, %s114
      %s117 = sphi 0, %s116
      %s131 = sphi 0, %s117
      %s135 = sphi 0, %s135
      %s137 = sphi 0, %s135
      %s138 = sphi 0, %s137
      %s152 = sphi 0, %s138
      %s156 = sphi 0, %s156
      %s158 = sphi 0, %s156
      %s159 = sphi 0, %s158
      %s173 = sphi 0, %s159
      %s179 = sphi 0, %s181
      %s182 = sphi 0, %s179
      %s183 = sphi 0, %s182
      %s199 = sphi 0, %s183
      %s205 = sphi 0, %s207
      %s208 = sphi 0, %s205
      %s209 = sphi 0, %s208
      %s225 = sphi 0, %s209
    $region4: #{nash_t5_layer_self_attention.1} parent=1 // loop_header_branch
      %20 = sbr.rel (%p18) target = $region8
    $region5: #{nash_t5_layer_self_attention.1} parent=1 // loop_body
      %s22 = ssub.s32 %s17, 1
      %s23 = ssub.s32 %s17, 2
      %s24 = sadd.s32 %s17, 1
      %s25 = ssub.s32 %s17, %s24
      %p26 = scmp.eq.s32.totalorder %s25, 0
      %s28 = sadd.s32 %s27, 1
      %s29 = scalar_select %p26, %s27, %s28
      %p32 = pneg %p26
      %p33 = scmp.eq.s32.totalorder %s17, 1
      %p34 = por %p32, %p33
      %p35 = scmp.ne.s32.totalorder %s27, %s30
      %p36 = scmp.eq.s32.totalorder %s17, 0
      %p37 = por %p35, %p36
      %p38 = scmp.ne.s32.totalorder %s27, %s30
      %p39 = scmp.eq.s32.totalorder %s22, 1
      %p40 = por %p38, %p39
      %p41 = scmp.ne.s32.totalorder %s30, %s31
      %p42 = scmp.eq.s32.totalorder %s22, 0
      %p43 = por %p41, %p42
      %p44 = scmp.ne.s32.totalorder %s30, %s31
      %p45 = scmp.eq.s32.totalorder %s23, 1
      %p46 = por %p44, %p45
      %p48 = scmp.ne.s32.totalorder %s31, %s47
      %p49 = scmp.eq.s32.totalorder %s23, 0
      %p50 = por %p48, %p49
      %s52 = sadd.s32 %s51, 1
      %p55 = scmp.eq.s32.totalorder %s17, 1
      %p56 = scmp.ne.s32.totalorder %s51, %s53
      %p57 = scmp.eq.s32.totalorder %s17, 0
      %p58 = por %p56, %p57
      %p59 = scmp.ne.s32.totalorder %s51, %s53
      %p60 = scmp.eq.s32.totalorder %s22, 1
      %p61 = por %p59, %p60
      %p62 = scmp.ne.s32.totalorder %s53, %s54
      %p63 = scmp.eq.s32.totalorder %s22, 0
      %p64 = por %p62, %p63
      %p65 = scmp.ne.s32.totalorder %s53, %s54
      %p66 = scmp.eq.s32.totalorder %s23, 1
      %p67 = por %p65, %p66
      %p69 = scmp.ne.s32.totalorder %s54, %s68
      %p70 = scmp.eq.s32.totalorder %s23, 0
      %p71 = por %p69, %p70
      %s73 = sadd.s32 %s72, 1
      %p76 = scmp.eq.s32.totalorder %s17, 1
      %p77 = scmp.ne.s32.totalorder %s72, %s74
      %p78 = scmp.eq.s32.totalorder %s17, 0
      %p79 = por %p77, %p78
      %p80 = scmp.ne.s32.totalorder %s72, %s74
      %p81 = scmp.eq.s32.totalorder %s22, 1
      %p82 = por %p80, %p81
      %p83 = scmp.ne.s32.totalorder %s74, %s75
      %p84 = scmp.eq.s32.totalorder %s22, 0
      %p85 = por %p83, %p84
      %p86 = scmp.ne.s32.totalorder %s74, %s75
      %p87 = scmp.eq.s32.totalorder %s23, 1
      %p88 = por %p86, %p87
      %p90 = scmp.ne.s32.totalorder %s75, %s89
      %p91 = scmp.eq.s32.totalorder %s23, 0
      %p92 = por %p90, %p91
      %s94 = sadd.s32 %s93, 1
      %p97 = scmp.eq.s32.totalorder %s17, 1
      %p98 = scmp.ne.s32.totalorder %s93, %s95
      %p99 = scmp.eq.s32.totalorder %s17, 0
      %p100 = por %p98, %p99
      %p101 = scmp.ne.s32.totalorder %s93, %s95
      %p102 = scmp.eq.s32.totalorder %s22, 1
      %p103 = por %p101, %p102
      %p104 = scmp.ne.s32.totalorder %s95, %s96
      %p105 = scmp.eq.s32.totalorder %s22, 0
      %p106 = por %p104, %p105
      %p107 = scmp.ne.s32.totalorder %s95, %s96
      %p108 = scmp.eq.s32.totalorder %s23, 1
      %p109 = por %p107, %p108
      %p111 = scmp.ne.s32.totalorder %s96, %s110
      %p112 = scmp.eq.s32.totalorder %s23, 0
      %p113 = por %p111, %p112
      %s115 = sadd.s32 %s114, 1
      %p118 = scmp.eq.s32.totalorder %s17, 1
      %p119 = scmp.ne.s32.totalorder %s114, %s116
      %p120 = scmp.eq.s32.totalorder %s17, 0
      %p121 = por %p119, %p120
      %p122 = scmp.ne.s32.totalorder %s114, %s116
      %p123 = scmp.eq.s32.totalorder %s22, 1
      %p124 = por %p122, %p123
      %p125 = scmp.ne.s32.totalorder %s116, %s117
      %p126 = scmp.eq.s32.totalorder %s22, 0
      %p127 = por %p125, %p126
      %p128 = scmp.ne.s32.totalorder %s116, %s117
      %p129 = scmp.eq.s32.totalorder %s23, 1
      %p130 = por %p128, %p129
      %p132 = scmp.ne.s32.totalorder %s117, %s131
      %p133 = scmp.eq.s32.totalorder %s23, 0
      %p134 = por %p132, %p133
      %s136 = sadd.s32 %s135, 1
      %p139 = scmp.eq.s32.totalorder %s17, 1
      %p140 = scmp.ne.s32.totalorder %s135, %s137
      %p141 = scmp.eq.s32.totalorder %s17, 0
      %p142 = por %p140, %p141
      %p143 = scmp.ne.s32.totalorder %s135, %s137
      %p144 = scmp.eq.s32.totalorder %s22, 1
      %p145 = por %p143, %p144
      %p146 = scmp.ne.s32.totalorder %s137, %s138
      %p147 = scmp.eq.s32.totalorder %s22, 0
      %p148 = por %p146, %p147
      %p149 = scmp.ne.s32.totalorder %s137, %s138
      %p150 = scmp.eq.s32.totalorder %s23, 1
      %p151 = por %p149, %p150
      %p153 = scmp.ne.s32.totalorder %s138, %s152
      %p154 = scmp.eq.s32.totalorder %s23, 0
      %p155 = por %p153, %p154
      %s157 = sadd.s32 %s156, 1
      %p160 = scmp.eq.s32.totalorder %s17, 1
      %p161 = scmp.ne.s32.totalorder %s156, %s158
      %p162 = scmp.eq.s32.totalorder %s17, 0
      %p163 = por %p161, %p162
      %p164 = scmp.ne.s32.totalorder %s156, %s158
      %p165 = scmp.eq.s32.totalorder %s22, 1
      %p166 = por %p164, %p165
      %p167 = scmp.ne.s32.totalorder %s158, %s159
      %p168 = scmp.eq.s32.totalorder %s22, 0
      %p169 = por %p167, %p168
      %p170 = scmp.ne.s32.totalorder %s158, %s159
      %p171 = scmp.eq.s32.totalorder %s23, 1
      %p172 = por %p170, %p171
      %p174 = scmp.ne.s32.totalorder %s159, %s173
      %p175 = scmp.eq.s32.totalorder %s23, 0
      %p176 = por %p174, %p175
      %s177 = ssub.s32 %s17, %s24
      %p178 = scmp.eq.s32.totalorder %s177, 0
      %s180 = sadd.s32 %s179, 1
      %s181 = scalar_select %p178, %s179, %s180
      %p184 = pneg %p178
      %p185 = scmp.eq.s32.totalorder %s17, 1
      %p186 = por %p184, %p185
      %p187 = scmp.ne.s32.totalorder %s179, %s182
      %p188 = scmp.eq.s32.totalorder %s17, 0
      %p189 = por %p187, %p188
      %p190 = scmp.ne.s32.totalorder %s179, %s182
      %p191 = scmp.eq.s32.totalorder %s22, 1
      %p192 = por %p190, %p191
      %p193 = scmp.ne.s32.totalorder %s182, %s183
      %p194 = scmp.eq.s32.totalorder %s22, 0
      %p195 = por %p193, %p194
      %p196 = scmp.ne.s32.totalorder %s182, %s183
      %p197 = scmp.eq.s32.totalorder %s23, 1
      %p198 = por %p196, %p197
      %p200 = scmp.ne.s32.totalorder %s183, %s199
      %p201 = scmp.eq.s32.totalorder %s23, 0
      %p202 = por %p200, %p201
      %s203 = ssub.s32 %s17, %s24
      %p204 = scmp.eq.s32.totalorder %s203, 0
      %s206 = sadd.s32 %s205, 1
      %s207 = scalar_select %p204, %s205, %s206
      %p210 = pneg %p204
      %p211 = scmp.eq.s32.totalorder %s17, 1
      %p212 = por %p210, %p211
      %p213 = scmp.ne.s32.totalorder %s205, %s208
      %p214 = scmp.eq.s32.totalorder %s17, 0
      %p215 = por %p213, %p214
      %p216 = scmp.ne.s32.totalorder %s205, %s208
      %p217 = scmp.eq.s32.totalorder %s22, 1
      %p218 = por %p216, %p217
      %p219 = scmp.ne.s32.totalorder %s208, %s209
      %p220 = scmp.eq.s32.totalorder %s22, 0
      %p221 = por %p219, %p220
      %p222 = scmp.ne.s32.totalorder %s208, %s209
      %p223 = scmp.eq.s32.totalorder %s23, 1
      %p224 = por %p222, %p223
      %p226 = scmp.ne.s32.totalorder %s209, %s225
      %p227 = scmp.eq.s32.totalorder %s23, 0
      %p228 = por %p226, %p227
      %p229 = scmp.le.s32.totalorder 1, %s17
      %p230 = scmp.lt.s32.totalorder %s17, 3
      %p231 = pnand %p229, %p230
      %p232 = pneg %p231
      // Predicated region
      $region9: #{nash_t5_layer_self_attention.1} parent=5 // pred_check
        _
      $region10: #{nash_t5_layer_self_attention.1} parent=5 // pred_check_branch
        %234 = sbr.rel (%p231) target = $region12
      $region11: #{nash_t5_layer_self_attention.1} parent=5 // pred_region
        %s235 = ssub.s32 %s17, 1
        // Predicated region
        $region13: #{nash_t5_layer_self_attention.1} parent=11 // pred_check
          %p236 = pneg %p64
        $region14: #{nash_t5_layer_self_attention.1} parent=11 // pred_check_branch
          %238 = sbr.rel (%p236) target = $region16
        $region15: #{nash_t5_layer_self_attention.1} parent=11 // pred_region
          _
        $region16: #{nash_t5_layer_self_attention.1} parent=11 // pred_fallthru
          _
        // Predicated region
        $region17: #{nash_t5_layer_self_attention.1} parent=11 // pred_check
          %p239 = pneg %p85
        $region18: #{nash_t5_layer_self_attention.1} parent=11 // pred_check_branch
          %241 = sbr.rel (%p239) target = $region20
        $region19: #{nash_t5_layer_self_attention.1} parent=11 // pred_region
          _
        $region20: #{nash_t5_layer_self_attention.1} parent=11 // pred_fallthru
          _
        // Predicated region
        $region21: #{nash_t5_layer_self_attention.1} parent=11 // pred_check
          %p242 = pneg %p106
        $region22: #{nash_t5_layer_self_attention.1} parent=11 // pred_check_branch
          %244 = sbr.rel (%p242) target = $region24
        $region23: #{nash_t5_layer_self_attention.1} parent=11 // pred_region
          _
        $region24: #{nash_t5_layer_self_attention.1} parent=11 // pred_fallthru
          _
        // Predicated region
        $region25: #{nash_t5_layer_self_attention.1} parent=11 // pred_check
          %p245 = pneg %p127
        $region26: #{nash_t5_layer_self_attention.1} parent=11 // pred_check_branch
          %247 = sbr.rel (%p245) target = $region28
        $region27: #{nash_t5_layer_self_attention.1} parent=11 // pred_region
          _
        $region28: #{nash_t5_layer_self_attention.1} parent=11 // pred_fallthru
          _
        // Predicated region
        $region29: #{nash_t5_layer_self_attention.1} parent=11 // pred_check
          %p248 = pneg %p148
        $region30: #{nash_t5_layer_self_attention.1} parent=11 // pred_check_branch
          %250 = sbr.rel (%p248) target = $region32
        $region31: #{nash_t5_layer_self_attention.1} parent=11 // pred_region
          _
        $region32: #{nash_t5_layer_self_attention.1} parent=11 // pred_fallthru
          _
        // Predicated region
        $region33: #{nash_t5_layer_self_attention.1} parent=11 // pred_check
          %p251 = pneg %p169
        $region34: #{nash_t5_layer_self_attention.1} parent=11 // pred_check_branch
          %253 = sbr.rel (%p251) target = $region36
        $region35: #{nash_t5_layer_self_attention.1} parent=11 // pred_region
          _
        $region36: #{nash_t5_layer_self_attention.1} parent=11 // pred_fallthru
          _
      $region12: #{nash_t5_layer_self_attention.1} parent=5 // pred_fallthru
        _
      %p254 = scmp.lt.s32.totalorder %s17, 2
      // Predicated region
      $region37: #{nash_t5_layer_self_attention.1} parent=5 // pred_check
        %p255 = pneg %p254
      $region38: #{nash_t5_layer_self_attention.1} parent=5 // pred_check_branch
        %257 = sbr.rel (%p255) target = $region40
      $region39: #{nash_t5_layer_self_attention.1} parent=5 // pred_region
        // Predicated region
        $region41: #{nash_t5_layer_self_attention.1} parent=39 // pred_check
          %p258 = pneg %p37
        $region42: #{nash_t5_layer_self_attention.1} parent=39 // pred_check_branch
          %260 = sbr.rel (%p258) target = $region44
        $region43: #{nash_t5_layer_self_attention.1} parent=39 // pred_region
          %p261 = scmp.lt.s32.totalorder %s17, 1
          %s262 = scalar_select %p261, %s17, 1
          %s263 = smul.addr %s262, 8
          %s264 = scalar_lea.vmem %s0, %s263
        $region44: #{nash_t5_layer_self_attention.1} parent=39 // pred_fallthru
          _
        // Predicated region
        $region45: #{nash_t5_layer_self_attention.1} parent=39 // pred_check
          %p265 = pneg %p189
        $region46: #{nash_t5_layer_self_attention.1} parent=39 // pred_check_branch
          %267 = sbr.rel (%p265) target = $region48
        $region47: #{nash_t5_layer_self_attention.1} parent=39 // pred_region
          %p268 = scmp.lt.s32.totalorder %s17, 1
          %s269 = scalar_select %p268, %s17, 1
          %s270 = scalar_lea.vmem %s7, %s269
        $region48: #{nash_t5_layer_self_attention.1} parent=39 // pred_fallthru
          _
      $region40: #{nash_t5_layer_self_attention.1} parent=5 // pred_fallthru
        _
      %p271 = scmp.le.s32.totalorder 1, %s17
      %p272 = scmp.lt.s32.totalorder %s17, 3
      %p273 = pnand %p271, %p272
      %p274 = pneg %p273
      // Predicated region
      $region49: #{nash_t5_layer_self_attention.1} parent=5 // pred_check
        _
      $region50: #{nash_t5_layer_self_attention.1} parent=5 // pred_check_branch
        %276 = sbr.rel (%p273) target = $region52
      $region51: #{nash_t5_layer_self_attention.1} parent=5 // pred_region
        %s277 = ssub.s32 %s17, 1
        %p278 = scmp.lt.s32.totalorder %s22, 1
        %s279 = scalar_select %p278, %s22, 1
        %s280 = smul.addr %s279, 8
        %s281 = scalar_lea.vmem %s0, %s280
        %p282 = pneg %p43
        %p283 = pneg %p40
        %p284 = pneg %p64
        %p285 = pneg %p61
        %p286 = pneg %p85
        %p287 = pneg %p82
        %p288 = pneg %p106
        %p289 = pneg %p103
        %p290 = pneg %p127
        %p291 = pneg %p124
        %p292 = pneg %p148
        %p293 = pneg %p145
        %p294 = pneg %p169
        %p295 = pneg %p166
        %p296 = scmp.lt.s32.totalorder %s22, 1
        %s297 = scalar_select %p296, %s22, 1
        %s298 = scalar_lea.vmem %s7, %s297
        %p299 = pneg %p195
        %p300 = pneg %p192
        %p301 = pneg %p221
        %p302 = pneg %p218
        %s303 = sand.u32 %s208, 1
        %s304 = scalar_lea.sflag [#allocation3], %s303
        %s305 = sand.u32 %s208, 1
        %s306 = smul.addr %s305, 8
        %s307 = scalar_lea.vmem [#allocation2], %s306
        %p308 = scmp.lt.s32.totalorder %s22, 1
        %s309 = scalar_select %p308, %s22, 1
        %s310 = smul.addr %s309, 8
        %s311 = scalar_lea.vmem %s0, %s310
        %p312 = scmp.lt.s32.totalorder %s22, 1
        %s313 = scalar_select %p312, %s22, 1
        %s314 = scalar_lea.vmem %s7, %s313
        %v315 = vld [vmem:[%s311] sm:$0xff]
        %v316 = vmul.f32 %v315, %v315
        %vm317 = vcmask 261120
        %v318 = vsel %vm317, %v316, 0.0
        %319 = vadd.xlane.f32.xlu0 %v318
        %v320 = vpop.xlane.xlu0 %319
        %v321 = vrcp.pop 32.0
        %v322 = vmul.f32 %v320, %v321
        %v323 = vadd.f32 %v322, 1e-06
        %v324 = vrsqrt.pop %v323
        %v325 = vmul.f32 %v315, %v324
        %v326 = vld [vmem:[%s1] sm:$0x1]
        %v328 = vlaneseq
        %v329 = vshrl.u32 %v328, 7
        %v330 = vsub.s32 0, %v329
        %v331 = vrot.slane %v326, %v330
        %v333 = vmul.f32 %v325, %v331
        %v334 = vld [vmem:[%s2] sm:$0xff]
        %v335 = vld [vmem:[%s2 + $0x8] sm:$0xff]
        %v336 = vld [vmem:[%s2 + $0x10] sm:$0xff]
        %v337 = vld [vmem:[%s2 + $0x18] sm:$0xff]
        %v339 = vsel %vm317, %v333, 0
        %341 = vmatprep.subr.mxu0 0.0
        %342 = vmatpush1.msra.mxu0 0.0
        %343 = vmatprep.subr.mxu0 0.0
        %344 = vmatpush1.msra.mxu0 0.0
        %345 = vmatprep.subr.mxu0 0.0
        %346 = vmatpush1.msra.mxu0 0.0
        %347 = vmatprep.subr.mxu0 0.0
        %348 = vmatpush1.msra.mxu0 0.0
        %349 = vmatprep.subr.mxu0 0.0
        %350 = vmatpush1.msra.mxu0 0.0
        %351 = vmatprep.subr.mxu0 0.0
        %352 = vmatpush1.msra.mxu0 0.0
        %353 = vmatprep.subr.mxu0 0.0
        %354 = vmatpush1.msra.mxu0 0.0
        %355 = vmatprep.subr.mxu0 0.0
        %356 = vmatpush1.msra.mxu0 0.0
        %357 = vmatprep.subr.mxu0 0.0
        %358 = vmatpush1.msra.mxu0 0.0
        %359 = vmatprep.subr.mxu0 0.0
        %360 = vmatpush1.msra.mxu0 0.0
        %361 = vmatprep.subr.mxu0 0.0
        %362 = vmatpush1.msra.mxu0 0.0
        %363 = vmatprep.subr.mxu0 0.0
        %364 = vmatpush1.msra.mxu0 0.0
        %365 = vmatprep.subr.mxu0 0.0
        %366 = vmatpush1.msra.mxu0 %v337
        %367 = vmatprep.subr.mxu0 0.0
        %368 = vmatpush1.msra.mxu0 %v336
        %369 = vmatprep.subr.mxu0 0.0
        %370 = vmatpush1.msra.mxu0 %v335
        %371 = vmatprep.subr.mxu0 0.0
        %372 = vmatpush1.msra.mxu0 %v334
        %373 = vmatprep.subr.mxu0 0.0
        %374 = vmatpush2.msra.mxu0 0.0
        %375 = vmatprep.subr.mxu0 0.0
        %376 = vmatpush2.msra.mxu0 0.0
        %377 = vmatprep.subr.mxu0 0.0
        %378 = vmatpush2.msra.mxu0 0.0
        %379 = vmatprep.subr.mxu0 0.0
        %380 = vmatpush2.msra.mxu0 0.0
        %381 = vmatprep.subr.mxu0 0.0
        %382 = vmatpush2.msra.mxu0 0.0
        %383 = vmatprep.subr.mxu0 0.0
        %384 = vmatpush2.msra.mxu0 0.0
        %385 = vmatprep.subr.mxu0 0.0
        %386 = vmatpush2.msra.mxu0 0.0
        %387 = vmatprep.subr.mxu0 0.0
        %388 = vmatpush2.msra.mxu0 0.0
        %389 = vmatprep.subr.mxu0 0.0
        %390 = vmatpush2.msra.mxu0 0.0
        %391 = vmatprep.subr.mxu0 0.0
        %392 = vmatpush2.msra.mxu0 0.0
        %393 = vmatprep.subr.mxu0 0.0
        %394 = vmatpush2.msra.mxu0 0.0
        %395 = vmatprep.subr.mxu0 0.0
        %396 = vmatpush2.msra.mxu0 0.0
        %397 = vmatprep.subr.mxu0 0.0
        %398 = vmatpush2.msra.mxu0 0.0
        %399 = vmatprep.subr.mxu0 0.0
        %400 = vmatpush2.msra.mxu0 0.0
        %401 = vmatprep.subr.mxu0 0.0
        %402 = vmatpush2.msra.mxu0 0.0
        %403 = vmatprep.subr.mxu0 0.0
        %404 = vmatpush2.msra.mxu0 0.0
        %405 = vmatprep.mubr.f32.mxu0 0.0
        %406 = vmatmul.mubr.f32.gmra.mxu0 %v339
        %v407 = vpop.f32.mrf.mxu0
        %v408 = vadd.f32 0.0, %v407
        %v409 = vpop.f32.mrf.mxu0
        %410 = vdwg.mxu0
        %v411 = vld [vmem:[%s3] sm:$0xff]
        %v412 = vld [vmem:[%s3 + $0x8] sm:$0xff]
        %v413 = vld [vmem:[%s3 + $0x10] sm:$0xff]
        %v414 = vld [vmem:[%s3 + $0x18] sm:$0xff]
        %415 = vmatprep.subr.mxu0 0.0
        %416 = vmatpush1.msra.mxu0 0.0
        %417 = vmatprep.subr.mxu0 0.0
        %418 = vmatpush1.msra.mxu0 0.0
        %419 = vmatprep.subr.mxu0 0.0
        %420 = vmatpush1.msra.mxu0 0.0
        %421 = vmatprep.subr.mxu0 0.0
        %422 = vmatpush1.msra.mxu0 0.0
        %423 = vmatprep.subr.mxu0 0.0
        %424 = vmatpush1.msra.mxu0 0.0
        %425 = vmatprep.subr.mxu0 0.0
        %426 = vmatpush1.msra.mxu0 0.0
        %427 = vmatprep.subr.mxu0 0.0
        %428 = vmatpush1.msra.mxu0 0.0
        %429 = vmatprep.subr.mxu0 0.0
        %430 = vmatpush1.msra.mxu0 0.0
        %431 = vmatprep.subr.mxu0 0.0
        %432 = vmatpush1.msra.mxu0 0.0
        %433 = vmatprep.subr.mxu0 0.0
        %434 = vmatpush1.msra.mxu0 0.0
        %435 = vmatprep.subr.mxu0 0.0
        %436 = vmatpush1.msra.mxu0 0.0
        %437 = vmatprep.subr.mxu0 0.0
        %438 = vmatpush1.msra.mxu0 0.0
        %439 = vmatprep.subr.mxu0 0.0
        %440 = vmatpush1.msra.mxu0 %v414
        %441 = vmatprep.subr.mxu0 0.0
        %442 = vmatpush1.msra.mxu0 %v413
        %443 = vmatprep.subr.mxu0 0.0
        %444 = vmatpush1.msra.mxu0 %v412
        %445 = vmatprep.subr.mxu0 0.0
        %446 = vmatpush1.msra.mxu0 %v411
        %447 = vmatprep.subr.mxu0 0.0
        %448 = vmatpush2.msra.mxu0 0.0
        %449 = vmatprep.subr.mxu0 0.0
        %450 = vmatpush2.msra.mxu0 0.0
        %451 = vmatprep.subr.mxu0 0.0
        %452 = vmatpush2.msra.mxu0 0.0
        %453 = vmatprep.subr.mxu0 0.0
        %454 = vmatpush2.msra.mxu0 0.0
        %455 = vmatprep.subr.mxu0 0.0
        %456 = vmatpush2.msra.mxu0 0.0
        %457 = vmatprep.subr.mxu0 0.0
        %458 = vmatpush2.msra.mxu0 0.0
        %459 = vmatprep.subr.mxu0 0.0
        %460 = vmatpush2.msra.mxu0 0.0
        %461 = vmatprep.subr.mxu0 0.0
        %462 = vmatpush2.msra.mxu0 0.0
        %463 = vmatprep.subr.mxu0 0.0
        %464 = vmatpush2.msra.mxu0 0.0
        %465 = vmatprep.subr.mxu0 0.0
        %466 = vmatpush2.msra.mxu0 0.0
        %467 = vmatprep.subr.mxu0 0.0
        %468 = vmatpush2.msra.mxu0 0.0
        %469 = vmatprep.subr.mxu0 0.0
        %470 = vmatpush2.msra.mxu0 0.0
        %471 = vmatprep.subr.mxu0 0.0
        %472 = vmatpush2.msra.mxu0 0.0
        %473 = vmatprep.subr.mxu0 0.0
        %474 = vmatpush2.msra.mxu0 0.0
        %475 = vmatprep.subr.mxu0 0.0
        %476 = vmatpush2.msra.mxu0 0.0
        %477 = vmatprep.subr.mxu0 0.0
        %478 = vmatpush2.msra.mxu0 0.0
        %479 = vmatprep.mubr.f32.mxu0 0.0
        %480 = vmatmul.mubr.f32.gmra.mxu0 %v339
        %v481 = vpop.f32.mrf.mxu0
        %v482 = vadd.f32 0.0, %v481
        %v483 = vpop.f32.mrf.mxu0
        %484 = vdwg.mxu0
        %v485 = vld [vmem:[%s4] sm:$0xff]
        %v486 = vld [vmem:[%s4 + $0x8] sm:$0xff]
        %v487 = vld [vmem:[%s4 + $0x10] sm:$0xff]
        %v488 = vld [vmem:[%s4 + $0x18] sm:$0xff]
        %489 = vmatprep.subr.mxu0 0.0
        %490 = vmatpush1.msra.mxu0 0.0
        %491 = vmatprep.subr.mxu0 0.0
        %492 = vmatpush1.msra.mxu0 0.0
        %493 = vmatprep.subr.mxu0 0.0
        %494 = vmatpush1.msra.mxu0 0.0
        %495 = vmatprep.subr.mxu0 0.0
        %496 = vmatpush1.msra.mxu0 0.0
        %497 = vmatprep.subr.mxu0 0.0
        %498 = vmatpush1.msra.mxu0 0.0
        %499 = vmatprep.subr.mxu0 0.0
        %500 = vmatpush1.msra.mxu0 0.0
        %501 = vmatprep.subr.mxu0 0.0
        %502 = vmatpush1.msra.mxu0 0.0
        %503 = vmatprep.subr.mxu0 0.0
        %504 = vmatpush1.msra.mxu0 0.0
        %505 = vmatprep.subr.mxu0 0.0
        %506 = vmatpush1.msra.mxu0 0.0
        %507 = vmatprep.subr.mxu0 0.0
        %508 = vmatpush1.msra.mxu0 0.0
        %509 = vmatprep.subr.mxu0 0.0
        %510 = vmatpush1.msra.mxu0 0.0
        %511 = vmatprep.subr.mxu0 0.0
        %512 = vmatpush1.msra.mxu0 0.0
        %513 = vmatprep.subr.mxu0 0.0
        %514 = vmatpush1.msra.mxu0 %v488
        %515 = vmatprep.subr.mxu0 0.0
        %516 = vmatpush1.msra.mxu0 %v487
        %517 = vmatprep.subr.mxu0 0.0
        %518 = vmatpush1.msra.mxu0 %v486
        %519 = vmatprep.subr.mxu0 0.0
        %520 = vmatpush1.msra.mxu0 %v485
        %521 = vmatprep.subr.mxu0 0.0
        %522 = vmatpush2.msra.mxu0 0.0
        %523 = vmatprep.subr.mxu0 0.0
        %524 = vmatpush2.msra.mxu0 0.0
        %525 = vmatprep.subr.mxu0 0.0
        %526 = vmatpush2.msra.mxu0 0.0
        %527 = vmatprep.subr.mxu0 0.0
        %528 = vmatpush2.msra.mxu0 0.0
        %529 = vmatprep.subr.mxu0 0.0
        %530 = vmatpush2.msra.mxu0 0.0
        %531 = vmatprep.subr.mxu0 0.0
        %532 = vmatpush2.msra.mxu0 0.0
        %533 = vmatprep.subr.mxu0 0.0
        %534 = vmatpush2.msra.mxu0 0.0
        %535 = vmatprep.subr.mxu0 0.0
        %536 = vmatpush2.msra.mxu0 0.0
        %537 = vmatprep.subr.mxu0 0.0
        %538 = vmatpush2.msra.mxu0 0.0
        %539 = vmatprep.subr.mxu0 0.0
        %540 = vmatpush2.msra.mxu0 0.0
        %541 = vmatprep.subr.mxu0 0.0
        %542 = vmatpush2.msra.mxu0 0.0
        %543 = vmatprep.subr.mxu0 0.0
        %544 = vmatpush2.msra.mxu0 0.0
        %545 = vmatprep.subr.mxu0 0.0
        %546 = vmatpush2.msra.mxu0 0.0
        %547 = vmatprep.subr.mxu0 0.0
        %548 = vmatpush2.msra.mxu0 0.0
        %549 = vmatprep.subr.mxu0 0.0
        %550 = vmatpush2.msra.mxu0 0.0
        %551 = vmatprep.subr.mxu0 0.0
        %552 = vmatpush2.msra.mxu0 0.0
        %553 = vmatprep.mubr.f32.mxu0 0.0
        %554 = vmatmul.mubr.f32.gmra.mxu0 %v339
        %v555 = vpop.f32.mrf.mxu0
        %v556 = vadd.f32 0.0, %v555
        %v557 = vpop.f32.mrf.mxu0
        %558 = vdwg.mxu0
        %v559 = vld [vmem:[%s314] sm:$0x1]
        %v560 = vld [vmem:[%s6] sm:$0xff]
        %vm561 = vcmask 64512
        %v563 = vsel %vm561, %v408, 0
        %v566 = vsel %vm561, %v482, 0
        %568 = vmatprep.subr.mxu0 0.0
        %569 = vmatpush1.xpose.msra.mxu0 0.0
        %570 = vmatprep.subr.mxu0 0.0
        %571 = vmatpush1.xpose.msra.mxu0 0.0
        %572 = vmatprep.subr.mxu0 0.0
        %573 = vmatpush1.xpose.msra.mxu0 0.0
        %574 = vmatprep.subr.mxu0 0.0
        %575 = vmatpush1.xpose.msra.mxu0 0.0
        %576 = vmatprep.subr.mxu0 0.0
        %577 = vmatpush1.xpose.msra.mxu0 0.0
        %578 = vmatprep.subr.mxu0 0.0
        %579 = vmatpush1.xpose.msra.mxu0 0.0
        %580 = vmatprep.subr.mxu0 0.0
        %581 = vmatpush1.xpose.msra.mxu0 0.0
        %582 = vmatprep.subr.mxu0 0.0
        %583 = vmatpush1.xpose.msra.mxu0 0.0
        %584 = vmatprep.subr.mxu0 0.0
        %585 = vmatpush1.xpose.msra.mxu0 0.0
        %586 = vmatprep.subr.mxu0 0.0
        %587 = vmatpush1.xpose.msra.mxu0 0.0
        %588 = vmatprep.subr.mxu0 0.0
        %589 = vmatpush1.xpose.msra.mxu0 0.0
        %590 = vmatprep.subr.mxu0 0.0
        %591 = vmatpush1.xpose.msra.mxu0 0.0
        %592 = vmatprep.subr.mxu0 0.0
        %593 = vmatpush1.xpose.msra.mxu0 0.0
        %594 = vmatprep.subr.mxu0 0.0
        %595 = vmatpush1.xpose.msra.mxu0 0.0
        %596 = vmatprep.subr.mxu0 0.0
        %597 = vmatpush1.xpose.msra.mxu0 0.0
        %598 = vmatprep.subr.mxu0 0.0
        %599 = vmatpush1.xpose.msra.mxu0 %v566
        %600 = vmatprep.subr.mxu0 0.0
        %601 = vmatpush2.xpose.msra.mxu0 0.0
        %602 = vmatprep.subr.mxu0 0.0
        %603 = vmatpush2.xpose.msra.mxu0 0.0
        %604 = vmatprep.subr.mxu0 0.0
        %605 = vmatpush2.xpose.msra.mxu0 0.0
        %606 = vmatprep.subr.mxu0 0.0
        %607 = vmatpush2.xpose.msra.mxu0 0.0
        %608 = vmatprep.subr.mxu0 0.0
        %609 = vmatpush2.xpose.msra.mxu0 0.0
        %610 = vmatprep.subr.mxu0 0.0
        %611 = vmatpush2.xpose.msra.mxu0 0.0
        %612 = vmatprep.subr.mxu0 0.0
        %613 = vmatpush2.xpose.msra.mxu0 0.0
        %614 = vmatprep.subr.mxu0 0.0
        %615 = vmatpush2.xpose.msra.mxu0 0.0
        %616 = vmatprep.subr.mxu0 0.0
        %617 = vmatpush2.xpose.msra.mxu0 0.0
        %618 = vmatprep.subr.mxu0 0.0
        %619 = vmatpush2.xpose.msra.mxu0 0.0
        %620 = vmatprep.subr.mxu0 0.0
        %621 = vmatpush2.xpose.msra.mxu0 0.0
        %622 = vmatprep.subr.mxu0 0.0
        %623 = vmatpush2.xpose.msra.mxu0 0.0
        %624 = vmatprep.subr.mxu0 0.0
        %625 = vmatpush2.xpose.msra.mxu0 0.0
        %626 = vmatprep.subr.mxu0 0.0
        %627 = vmatpush2.xpose.msra.mxu0 0.0
        %628 = vmatprep.subr.mxu0 0.0
        %629 = vmatpush2.xpose.msra.mxu0 0.0
        %630 = vmatprep.subr.mxu0 0.0
        %631 = vmatpush2.xpose.msra.mxu0 0.0
        %632 = vmatprep.mubr.f32.mxu0 0.0
        %633 = vmatmul.mubr.f32.gmra.mxu0 %v563
        %v634 = vpop.f32.mrf.mxu0
        %v635 = vadd.f32 %v560, %v634
        %v636 = vpop.f32.mrf.mxu0
        %637 = vdwg.mxu0
        %v639 = vlaneseq
        %v640 = vshrl.u32 %v639, 7
        %v641 = vsub.s32 0, %v640
        %v642 = vrot.slane %v559, %v641
        %v644 = vadd.f32 %v635, %v642
        %v645 = vsel %vm561, %v644, -inf
        %646 = vmax.xlane.f32.xlu0 %v645
        %v647 = vpop.xlane.xlu0 %646
        %v648 = vsub.f32 %v644, %v647
        %v649 = vmul.f32 %v648, 1.442695
        %v650 = vpow.pop %v649
        %v651 = vsel %vm561, %v650, 0.0
        %652 = vadd.xlane.f32.xlu0 %v651
        %v653 = vpop.xlane.xlu0 %652
        %v654 = vrcp.pop %v653
        %v655 = vmul.f32 %v650, %v654
        %v657 = vsel %vm561, %v655, 0
        %659 = vmatprep.subr.mxu0 0.0
        %660 = vmatpush1.msra.mxu0 0.0
        %661 = vmatprep.subr.mxu0 0.0
        %662 = vmatpush1.msra.mxu0 0.0
        %663 = vmatprep.subr.mxu0 0.0
        %664 = vmatpush1.msra.mxu0 0.0
        %665 = vmatprep.subr.mxu0 0.0
        %666 = vmatpush1.msra.mxu0 0.0
        %667 = vmatprep.subr.mxu0 0.0
        %668 = vmatpush1.msra.mxu0 0.0
        %669 = vmatprep.subr.mxu0 0.0
        %670 = vmatpush1.msra.mxu0 0.0
        %671 = vmatprep.subr.mxu0 0.0
        %672 = vmatpush1.msra.mxu0 0.0
        %673 = vmatprep.subr.mxu0 0.0
        %674 = vmatpush1.msra.mxu0 0.0
        %675 = vmatprep.subr.mxu0 0.0
        %676 = vmatpush1.msra.mxu0 0.0
        %677 = vmatprep.subr.mxu0 0.0
        %678 = vmatpush1.msra.mxu0 0.0
        %679 = vmatprep.subr.mxu0 0.0
        %680 = vmatpush1.msra.mxu0 0.0
        %681 = vmatprep.subr.mxu0 0.0
        %682 = vmatpush1.msra.mxu0 0.0
        %683 = vmatprep.subr.mxu0 0.0
        %684 = vmatpush1.msra.mxu0 0.0
        %685 = vmatprep.subr.mxu0 0.0
        %686 = vmatpush1.msra.mxu0 0.0
        %687 = vmatprep.subr.mxu0 0.0
        %688 = vmatpush1.msra.mxu0 0.0
        %689 = vmatprep.subr.mxu0 0.0
        %690 = vmatpush1.msra.mxu0 %v556
        %691 = vmatprep.subr.mxu0 0.0
        %692 = vmatpush2.msra.mxu0 0.0
        %693 = vmatprep.subr.mxu0 0.0
        %694 = vmatpush2.msra.mxu0 0.0
        %695 = vmatprep.subr.mxu0 0.0
        %696 = vmatpush2.msra.mxu0 0.0
        %697 = vmatprep.subr.mxu0 0.0
        %698 = vmatpush2.msra.mxu0 0.0
        %699 = vmatprep.subr.mxu0 0.0
        %700 = vmatpush2.msra.mxu0 0.0
        %701 = vmatprep.subr.mxu0 0.0
        %702 = vmatpush2.msra.mxu0 0.0
        %703 = vmatprep.subr.mxu0 0.0
        %704 = vmatpush2.msra.mxu0 0.0
        %705 = vmatprep.subr.mxu0 0.0
        %706 = vmatpush2.msra.mxu0 0.0
        %707 = vmatprep.subr.mxu0 0.0
        %708 = vmatpush2.msra.mxu0 0.0
        %709 = vmatprep.subr.mxu0 0.0
        %710 = vmatpush2.msra.mxu0 0.0
        %711 = vmatprep.subr.mxu0 0.0
        %712 = vmatpush2.msra.mxu0 0.0
        %713 = vmatprep.subr.mxu0 0.0
        %714 = vmatpush2.msra.mxu0 0.0
        %715 = vmatprep.subr.mxu0 0.0
        %716 = vmatpush2.msra.mxu0 0.0
        %717 = vmatprep.subr.mxu0 0.0
        %718 = vmatpush2.msra.mxu0 0.0
        %719 = vmatprep.subr.mxu0 0.0
        %720 = vmatpush2.msra.mxu0 0.0
        %721 = vmatprep.subr.mxu0 0.0
        %722 = vmatpush2.msra.mxu0 0.0
        %723 = vmatprep.mubr.f32.mxu0 0.0
        %724 = vmatmul.mubr.f32.gmra.mxu0 %v657
        %v725 = vpop.f32.mrf.mxu0
        %v726 = vadd.f32 0.0, %v725
        %v727 = vpop.f32.mrf.mxu0
        %728 = vdwg.mxu0
        %v729 = vld [vmem:[%s5] sm:$0xff]
        %s730 = scalar_lea.vmem %s6, 8
        %v731 = vld [vmem:[%s730] sm:$0xff]
        %732 = vrot.lane.b32.xlu0 %v408, 120
        %v733 = vpop.permute.xlu0 %732
        %734 = vrot.lane.b32.xlu0 %v482, 120
        %v735 = vpop.permute.xlu0 %734
        %v736 = vsel %vm561, %v733, 0
        %v738 = vsel %vm561, %v735, 0
        %740 = vmatprep.subr.mxu0 0.0
        %741 = vmatpush1.xpose.msra.mxu0 0.0
        %742 = vmatprep.subr.mxu0 0.0
        %743 = vmatpush1.xpose.msra.mxu0 0.0
        %744 = vmatprep.subr.mxu0 0.0
        %745 = vmatpush1.xpose.msra.mxu0 0.0
        %746 = vmatprep.subr.mxu0 0.0
        %747 = vmatpush1.xpose.msra.mxu0 0.0
        %748 = vmatprep.subr.mxu0 0.0
        %749 = vmatpush1.xpose.msra.mxu0 0.0
        %750 = vmatprep.subr.mxu0 0.0
        %751 = vmatpush1.xpose.msra.mxu0 0.0
        %752 = vmatprep.subr.mxu0 0.0
        %753 = vmatpush1.xpose.msra.mxu0 0.0
        %754 = vmatprep.subr.mxu0 0.0
        %755 = vmatpush1.xpose.msra.mxu0 0.0
        %756 = vmatprep.subr.mxu0 0.0
        %757 = vmatpush1.xpose.msra.mxu0 0.0
        %758 = vmatprep.subr.mxu0 0.0
        %759 = vmatpush1.xpose.msra.mxu0 0.0
        %760 = vmatprep.subr.mxu0 0.0
        %761 = vmatpush1.xpose.msra.mxu0 0.0
        %762 = vmatprep.subr.mxu0 0.0
        %763 = vmatpush1.xpose.msra.mxu0 0.0
        %764 = vmatprep.subr.mxu0 0.0
        %765 = vmatpush1.xpose.msra.mxu0 0.0
        %766 = vmatprep.subr.mxu0 0.0
        %767 = vmatpush1.xpose.msra.mxu0 0.0
        %768 = vmatprep.subr.mxu0 0.0
        %769 = vmatpush1.xpose.msra.mxu0 0.0
        %770 = vmatprep.subr.mxu0 0.0
        %771 = vmatpush1.xpose.msra.mxu0 %v738
        %772 = vmatprep.subr.mxu0 0.0
        %773 = vmatpush2.xpose.msra.mxu0 0.0
        %774 = vmatprep.subr.mxu0 0.0
        %775 = vmatpush2.xpose.msra.mxu0 0.0
        %776 = vmatprep.subr.mxu0 0.0
        %777 = vmatpush2.xpose.msra.mxu0 0.0
        %778 = vmatprep.subr.mxu0 0.0
        %779 = vmatpush2.xpose.msra.mxu0 0.0
        %780 = vmatprep.subr.mxu0 0.0
        %781 = vmatpush2.xpose.msra.mxu0 0.0
        %782 = vmatprep.subr.mxu0 0.0
        %783 = vmatpush2.xpose.msra.mxu0 0.0
        %784 = vmatprep.subr.mxu0 0.0
        %785 = vmatpush2.xpose.msra.mxu0 0.0
        %786 = vmatprep.subr.mxu0 0.0
        %787 = vmatpush2.xpose.msra.mxu0 0.0
        %788 = vmatprep.subr.mxu0 0.0
        %789 = vmatpush2.xpose.msra.mxu0 0.0
        %790 = vmatprep.subr.mxu0 0.0
        %791 = vmatpush2.xpose.msra.mxu0 0.0
        %792 = vmatprep.subr.mxu0 0.0
        %793 = vmatpush2.xpose.msra.mxu0 0.0
        %794 = vmatprep.subr.mxu0 0.0
        %795 = vmatpush2.xpose.msra.mxu0 0.0
        %796 = vmatprep.subr.mxu0 0.0
        %797 = vmatpush2.xpose.msra.mxu0 0.0
        %798 = vmatprep.subr.mxu0 0.0
        %799 = vmatpush2.xpose.msra.mxu0 0.0
        %800 = vmatprep.subr.mxu0 0.0
        %801 = vmatpush2.xpose.msra.mxu0 0.0
        %802 = vmatprep.subr.mxu0 0.0
        %803 = vmatpush2.xpose.msra.mxu0 0.0
        %804 = vmatprep.mubr.f32.mxu0 0.0
        %805 = vmatmul.mubr.f32.gmra.mxu0 %v736
        %v806 = vpop.f32.mrf.mxu0
        %v807 = vadd.f32 %v731, %v806
        %v808 = vpop.f32.mrf.mxu0
        %809 = vdwg.mxu0
        %v810 = vadd.f32 %v807, %v642
        %v811 = vsel %vm561, %v810, -inf
        %812 = vmax.xlane.f32.xlu0 %v811
        %v813 = vpop.xlane.xlu0 %812
        %v814 = vsub.f32 %v810, %v813
        %v815 = vmul.f32 %v814, 1.442695
        %v816 = vpow.pop %v815
        %v817 = vsel %vm561, %v816, 0.0
        %818 = vadd.xlane.f32.xlu0 %v817
        %v819 = vpop.xlane.xlu0 %818
        %v820 = vrcp.pop %v819
        %v821 = vmul.f32 %v816, %v820
        %823 = vrot.lane.b32.xlu0 %v556, 120
        %v824 = vpop.permute.xlu0 %823
        %v827 = vsel %vm561, %v821, 0
        %829 = vmatprep.subr.mxu0 0.0
        %830 = vmatpush1.msra.mxu0 0.0
        %831 = vmatprep.subr.mxu0 0.0
        %832 = vmatpush1.msra.mxu0 0.0
        %833 = vmatprep.subr.mxu0 0.0
        %834 = vmatpush1.msra.mxu0 0.0
        %835 = vmatprep.subr.mxu0 0.0
        %836 = vmatpush1.msra.mxu0 0.0
        %837 = vmatprep.subr.mxu0 0.0
        %838 = vmatpush1.msra.mxu0 0.0
        %839 = vmatprep.subr.mxu0 0.0
        %840 = vmatpush1.msra.mxu0 0.0
        %841 = vmatprep.subr.mxu0 0.0
        %842 = vmatpush1.msra.mxu0 0.0
        %843 = vmatprep.subr.mxu0 0.0
        %844 = vmatpush1.msra.mxu0 0.0
        %845 = vmatprep.subr.mxu0 0.0
        %846 = vmatpush1.msra.mxu0 0.0
        %847 = vmatprep.subr.mxu0 0.0
        %848 = vmatpush1.msra.mxu0 0.0
        %849 = vmatprep.subr.mxu0 0.0
        %850 = vmatpush1.msra.mxu0 0.0
        %851 = vmatprep.subr.mxu0 0.0
        %852 = vmatpush1.msra.mxu0 0.0
        %853 = vmatprep.subr.mxu0 0.0
        %854 = vmatpush1.msra.mxu0 0.0
        %855 = vmatprep.subr.mxu0 0.0
        %856 = vmatpush1.msra.mxu0 0.0
        %857 = vmatprep.subr.mxu0 0.0
        %858 = vmatpush1.msra.mxu0 0.0
        %859 = vmatprep.subr.mxu0 0.0
        %860 = vmatpush1.msra.mxu0 %v824
        %861 = vmatprep.subr.mxu0 0.0
        %862 = vmatpush2.msra.mxu0 0.0
        %863 = vmatprep.subr.mxu0 0.0
        %864 = vmatpush2.msra.mxu0 0.0
        %865 = vmatprep.subr.mxu0 0.0
        %866 = vmatpush2.msra.mxu0 0.0
        %867 = vmatprep.subr.mxu0 0.0
        %868 = vmatpush2.msra.mxu0 0.0
        %869 = vmatprep.subr.mxu0 0.0
        %870 = vmatpush2.msra.mxu0 0.0
        %871 = vmatprep.subr.mxu0 0.0
        %872 = vmatpush2.msra.mxu0 0.0
        %873 = vmatprep.subr.mxu0 0.0
        %874 = vmatpush2.msra.mxu0 0.0
        %875 = vmatprep.subr.mxu0 0.0
        %876 = vmatpush2.msra.mxu0 0.0
        %877 = vmatprep.subr.mxu0 0.0
        %878 = vmatpush2.msra.mxu0 0.0
        %879 = vmatprep.subr.mxu0 0.0
        %880 = vmatpush2.msra.mxu0 0.0
        %881 = vmatprep.subr.mxu0 0.0
        %882 = vmatpush2.msra.mxu0 0.0
        %883 = vmatprep.subr.mxu0 0.0
        %884 = vmatpush2.msra.mxu0 0.0
        %885 = vmatprep.subr.mxu0 0.0
        %886 = vmatpush2.msra.mxu0 0.0
        %887 = vmatprep.subr.mxu0 0.0
        %888 = vmatpush2.msra.mxu0 0.0
        %889 = vmatprep.subr.mxu0 0.0
        %890 = vmatpush2.msra.mxu0 0.0
        %891 = vmatprep.subr.mxu0 0.0
        %892 = vmatpush2.msra.mxu0 0.0
        %893 = vmatprep.mubr.f32.mxu0 0.0
        %894 = vmatmul.mubr.f32.gmra.mxu0 %v827
        %v895 = vpop.f32.mrf.mxu0
        %v896 = vadd.f32 0.0, %v895
        %v897 = vpop.f32.mrf.mxu0
        %898 = vdwg.mxu0
        %v899 = vld [vmem:[%s5 + $0x8] sm:$0xff]
        %v901 = vsel %vm561, %v896, 0
        %903 = vmatprep.subr.mxu0 0.0
        %904 = vmatpush1.msra.mxu0 0.0
        %905 = vmatprep.subr.mxu0 0.0
        %906 = vmatpush1.msra.mxu0 0.0
        %907 = vmatprep.subr.mxu0 0.0
        %908 = vmatpush1.msra.mxu0 0.0
        %909 = vmatprep.subr.mxu0 0.0
        %910 = vmatpush1.msra.mxu0 0.0
        %911 = vmatprep.subr.mxu0 0.0
        %912 = vmatpush1.msra.mxu0 0.0
        %913 = vmatprep.subr.mxu0 0.0
        %914 = vmatpush1.msra.mxu0 0.0
        %915 = vmatprep.subr.mxu0 0.0
        %916 = vmatpush1.msra.mxu0 0.0
        %917 = vmatprep.subr.mxu0 0.0
        %918 = vmatpush1.msra.mxu0 0.0
        %919 = vmatprep.subr.mxu0 0.0
        %920 = vmatpush1.msra.mxu0 0.0
        %921 = vmatprep.subr.mxu0 0.0
        %922 = vmatpush1.msra.mxu0 0.0
        %923 = vmatprep.subr.mxu0 0.0
        %924 = vmatpush1.msra.mxu0 0.0
        %925 = vmatprep.subr.mxu0 0.0
        %926 = vmatpush1.msra.mxu0 0.0
        %927 = vmatprep.subr.mxu0 0.0
        %928 = vmatpush1.msra.mxu0 0.0
        %929 = vmatprep.subr.mxu0 0.0
        %930 = vmatpush1.msra.mxu0 0.0
        %931 = vmatprep.subr.mxu0 0.0
        %932 = vmatpush1.msra.mxu0 0.0
        %933 = vmatprep.subr.mxu0 0.0
        %934 = vmatpush1.msra.mxu0 %v899
        %935 = vmatprep.subr.mxu0 0.0
        %936 = vmatpush2.msra.mxu0 0.0
        %937 = vmatprep.subr.mxu0 0.0
        %938 = vmatpush2.msra.mxu0 0.0
        %939 = vmatprep.subr.mxu0 0.0
        %940 = vmatpush2.msra.mxu0 0.0
        %941 = vmatprep.subr.mxu0 0.0
        %942 = vmatpush2.msra.mxu0 0.0
        %943 = vmatprep.subr.mxu0 0.0
        %944 = vmatpush2.msra.mxu0 0.0
        %945 = vmatprep.subr.mxu0 0.0
        %946 = vmatpush2.msra.mxu0 0.0
        %947 = vmatprep.subr.mxu0 0.0
        %948 = vmatpush2.msra.mxu0 0.0
        %949 = vmatprep.subr.mxu0 0.0
        %950 = vmatpush2.msra.mxu0 0.0
        %951 = vmatprep.subr.mxu0 0.0
        %952 = vmatpush2.msra.mxu0 0.0
        %953 = vmatprep.subr.mxu0 0.0
        %954 = vmatpush2.msra.mxu0 0.0
        %955 = vmatprep.subr.mxu0 0.0
        %956 = vmatpush2.msra.mxu0 0.0
        %957 = vmatprep.subr.mxu0 0.0
        %958 = vmatpush2.msra.mxu0 0.0
        %959 = vmatprep.subr.mxu0 0.0
        %960 = vmatpush2.msra.mxu0 0.0
        %961 = vmatprep.subr.mxu0 0.0
        %962 = vmatpush2.msra.mxu0 0.0
        %963 = vmatprep.subr.mxu0 0.0
        %964 = vmatpush2.msra.mxu0 0.0
        %965 = vmatprep.subr.mxu0 0.0
        %966 = vmatpush2.msra.mxu0 0.0
        %967 = vmatprep.mubr.f32.mxu0 0.0
        %968 = vmatmul.mubr.f32.gmra.mxu0 %v901
        %v969 = vpop.f32.mrf.mxu0
        %v970 = vadd.f32 0.0, %v969
        %v971 = vpop.f32.mrf.mxu0
        %972 = vdwg.mxu0
        %v974 = vsel %vm561, %v726, 0
        %976 = vmatprep.subr.mxu0 0.0
        %977 = vmatpush1.msra.mxu0 0.0
        %978 = vmatprep.subr.mxu0 0.0
        %979 = vmatpush1.msra.mxu0 0.0
        %980 = vmatprep.subr.mxu0 0.0
        %981 = vmatpush1.msra.mxu0 0.0
        %982 = vmatprep.subr.mxu0 0.0
        %983 = vmatpush1.msra.mxu0 0.0
        %984 = vmatprep.subr.mxu0 0.0
        %985 = vmatpush1.msra.mxu0 0.0
        %986 = vmatprep.subr.mxu0 0.0
        %987 = vmatpush1.msra.mxu0 0.0
        %988 = vmatprep.subr.mxu0 0.0
        %989 = vmatpush1.msra.mxu0 0.0
        %990 = vmatprep.subr.mxu0 0.0
        %991 = vmatpush1.msra.mxu0 0.0
        %992 = vmatprep.subr.mxu0 0.0
        %993 = vmatpush1.msra.mxu0 0.0
        %994 = vmatprep.subr.mxu0 0.0
        %995 = vmatpush1.msra.mxu0 0.0
        %996 = vmatprep.subr.mxu0 0.0
        %997 = vmatpush1.msra.mxu0 0.0
        %998 = vmatprep.subr.mxu0 0.0
        %999 = vmatpush1.msra.mxu0 0.0
        %1000 = vmatprep.subr.mxu0 0.0
        %1001 = vmatpush1.msra.mxu0 0.0
        %1002 = vmatprep.subr.mxu0 0.0
        %1003 = vmatpush1.msra.mxu0 0.0
        %1004 = vmatprep.subr.mxu0 0.0
        %1005 = vmatpush1.msra.mxu0 0.0
        %1006 = vmatprep.subr.mxu0 0.0
        %1007 = vmatpush1.msra.mxu0 %v729
        %1008 = vmatprep.subr.mxu0 0.0
        %1009 = vmatpush2.msra.mxu0 0.0
        %1010 = vmatprep.subr.mxu0 0.0
        %1011 = vmatpush2.msra.mxu0 0.0
        %1012 = vmatprep.subr.mxu0 0.0
        %1013 = vmatpush2.msra.mxu0 0.0
        %1014 = vmatprep.subr.mxu0 0.0
        %1015 = vmatpush2.msra.mxu0 0.0
        %1016 = vmatprep.subr.mxu0 0.0
        %1017 = vmatpush2.msra.mxu0 0.0
        %1018 = vmatprep.subr.mxu0 0.0
        %1019 = vmatpush2.msra.mxu0 0.0
        %1020 = vmatprep.subr.mxu0 0.0
        %1021 = vmatpush2.msra.mxu0 0.0
        %1022 = vmatprep.subr.mxu0 0.0
        %1023 = vmatpush2.msra.mxu0 0.0
        %1024 = vmatprep.subr.mxu0 0.0
        %1025 = vmatpush2.msra.mxu0 0.0
        %1026 = vmatprep.subr.mxu0 0.0
        %1027 = vmatpush2.msra.mxu0 0.0
        %1028 = vmatprep.subr.mxu0 0.0
        %1029 = vmatpush2.msra.mxu0 0.0
        %1030 = vmatprep.subr.mxu0 0.0
        %1031 = vmatpush2.msra.mxu0 0.0
        %1032 = vmatprep.subr.mxu0 0.0
        %1033 = vmatpush2.msra.mxu0 0.0
        %1034 = vmatprep.subr.mxu0 0.0
        %1035 = vmatpush2.msra.mxu0 0.0
        %1036 = vmatprep.subr.mxu0 0.0
        %1037 = vmatpush2.msra.mxu0 0.0
        %1038 = vmatprep.subr.mxu0 0.0
        %1039 = vmatpush2.msra.mxu0 0.0
        %1040 = vmatprep.mubr.f32.mxu0 0.0
        %1041 = vmatmul.mubr.f32.gmra.mxu0 %v974
        %v1042 = vpop.f32.mrf.mxu0
        %v1043 = vadd.f32 %v970, %v1042
        %v1044 = vpop.f32.mrf.mxu0
        %1045 = vdwg.mxu0
        %s1046 = scalar_lea.vmem %s6, 16
        %v1047 = vld [vmem:[%s1046] sm:$0xff]
        %1048 = vrot.lane.b32.xlu0 %v408, 112
        %v1049 = vpop.permute.xlu0 %1048
        %1050 = vrot.lane.b32.xlu0 %v482, 112
        %v1051 = vpop.permute.xlu0 %1050
        %v1052 = vsel %vm561, %v1049, 0
        %v1054 = vsel %vm561, %v1051, 0
        %1056 = vmatprep.subr.mxu0 0.0
        %1057 = vmatpush1.xpose.msra.mxu0 0.0
        %1058 = vmatprep.subr.mxu0 0.0
        %1059 = vmatpush1.xpose.msra.mxu0 0.0
        %1060 = vmatprep.subr.mxu0 0.0
        %1061 = vmatpush1.xpose.msra.mxu0 0.0
        %1062 = vmatprep.subr.mxu0 0.0
        %1063 = vmatpush1.xpose.msra.mxu0 0.0
        %1064 = vmatprep.subr.mxu0 0.0
        %1065 = vmatpush1.xpose.msra.mxu0 0.0
        %1066 = vmatprep.subr.mxu0 0.0
        %1067 = vmatpush1.xpose.msra.mxu0 0.0
        %1068 = vmatprep.subr.mxu0 0.0
        %1069 = vmatpush1.xpose.msra.mxu0 0.0
        %1070 = vmatprep.subr.mxu0 0.0
        %1071 = vmatpush1.xpose.msra.mxu0 0.0
        %1072 = vmatprep.subr.mxu0 0.0
        %1073 = vmatpush1.xpose.msra.mxu0 0.0
        %1074 = vmatprep.subr.mxu0 0.0
        %1075 = vmatpush1.xpose.msra.mxu0 0.0
        %1076 = vmatprep.subr.mxu0 0.0
        %1077 = vmatpush1.xpose.msra.mxu0 0.0
        %1078 = vmatprep.subr.mxu0 0.0
        %1079 = vmatpush1.xpose.msra.mxu0 0.0
        %1080 = vmatprep.subr.mxu0 0.0
        %1081 = vmatpush1.xpose.msra.mxu0 0.0
        %1082 = vmatprep.subr.mxu0 0.0
        %1083 = vmatpush1.xpose.msra.mxu0 0.0
        %1084 = vmatprep.subr.mxu0 0.0
        %1085 = vmatpush1.xpose.msra.mxu0 0.0
        %1086 = vmatprep.subr.mxu0 0.0
        %1087 = vmatpush1.xpose.msra.mxu0 %v1054
        %1088 = vmatprep.subr.mxu0 0.0
        %1089 = vmatpush2.xpose.msra.mxu0 0.0
        %1090 = vmatprep.subr.mxu0 0.0
        %1091 = vmatpush2.xpose.msra.mxu0 0.0
        %1092 = vmatprep.subr.mxu0 0.0
        %1093 = vmatpush2.xpose.msra.mxu0 0.0
        %1094 = vmatprep.subr.mxu0 0.0
        %1095 = vmatpush2.xpose.msra.mxu0 0.0
        %1096 = vmatprep.subr.mxu0 0.0
        %1097 = vmatpush2.xpose.msra.mxu0 0.0
        %1098 = vmatprep.subr.mxu0 0.0
        %1099 = vmatpush2.xpose.msra.mxu0 0.0
        %1100 = vmatprep.subr.mxu0 0.0
        %1101 = vmatpush2.xpose.msra.mxu0 0.0
        %1102 = vmatprep.subr.mxu0 0.0
        %1103 = vmatpush2.xpose.msra.mxu0 0.0
        %1104 = vmatprep.subr.mxu0 0.0
        %1105 = vmatpush2.xpose.msra.mxu0 0.0
        %1106 = vmatprep.subr.mxu0 0.0
        %1107 = vmatpush2.xpose.msra.mxu0 0.0
        %1108 = vmatprep.subr.mxu0 0.0
        %1109 = vmatpush2.xpose.msra.mxu0 0.0
        %1110 = vmatprep.subr.mxu0 0.0
        %1111 = vmatpush2.xpose.msra.mxu0 0.0
        %1112 = vmatprep.subr.mxu0 0.0
        %1113 = vmatpush2.xpose.msra.mxu0 0.0
        %1114 = vmatprep.subr.mxu0 0.0
        %1115 = vmatpush2.xpose.msra.mxu0 0.0
        %1116 = vmatprep.subr.mxu0 0.0
        %1117 = vmatpush2.xpose.msra.mxu0 0.0
        %1118 = vmatprep.subr.mxu0 0.0
        %1119 = vmatpush2.xpose.msra.mxu0 0.0
        %1120 = vmatprep.mubr.f32.mxu0 0.0
        %1121 = vmatmul.mubr.f32.gmra.mxu0 %v1052
        %v1122 = vpop.f32.mrf.mxu0
        %v1123 = vadd.f32 %v1047, %v1122
        %v1124 = vpop.f32.mrf.mxu0
        %1125 = vdwg.mxu0
        %v1126 = vadd.f32 %v1123, %v642
        %v1127 = vsel %vm561, %v1126, -inf
        %1128 = vmax.xlane.f32.xlu0 %v1127
        %v1129 = vpop.xlane.xlu0 %1128
        %v1130 = vsub.f32 %v1126, %v1129
        %v1131 = vmul.f32 %v1130, 1.442695
        %v1132 = vpow.pop %v1131
        %v1133 = vsel %vm561, %v1132, 0.0
        %1134 = vadd.xlane.f32.xlu0 %v1133
        %v1135 = vpop.xlane.xlu0 %1134
        %v1136 = vrcp.pop %v1135
        %v1137 = vmul.f32 %v1132, %v1136
        %1138 = vrot.lane.b32.xlu0 %v556, 112
        %v1139 = vpop.permute.xlu0 %1138
        %v1142 = vsel %vm561, %v1137, 0
        %1144 = vmatprep.subr.mxu0 0.0
        %1145 = vmatpush1.msra.mxu0 0.0
        %1146 = vmatprep.subr.mxu0 0.0
        %1147 = vmatpush1.msra.mxu0 0.0
        %1148 = vmatprep.subr.mxu0 0.0
        %1149 = vmatpush1.msra.mxu0 0.0
        %1150 = vmatprep.subr.mxu0 0.0
        %1151 = vmatpush1.msra.mxu0 0.0
        %1152 = vmatprep.subr.mxu0 0.0
        %1153 = vmatpush1.msra.mxu0 0.0
        %1154 = vmatprep.subr.mxu0 0.0
        %1155 = vmatpush1.msra.mxu0 0.0
        %1156 = vmatprep.subr.mxu0 0.0
        %1157 = vmatpush1.msra.mxu0 0.0
        %1158 = vmatprep.subr.mxu0 0.0
        %1159 = vmatpush1.msra.mxu0 0.0
        %1160 = vmatprep.subr.mxu0 0.0
        %1161 = vmatpush1.msra.mxu0 0.0
        %1162 = vmatprep.subr.mxu0 0.0
        %1163 = vmatpush1.msra.mxu0 0.0
        %1164 = vmatprep.subr.mxu0 0.0
        %1165 = vmatpush1.msra.mxu0 0.0
        %1166 = vmatprep.subr.mxu0 0.0
        %1167 = vmatpush1.msra.mxu0 0.0
        %1168 = vmatprep.subr.mxu0 0.0
        %1169 = vmatpush1.msra.mxu0 0.0
        %1170 = vmatprep.subr.mxu0 0.0
        %1171 = vmatpush1.msra.mxu0 0.0
        %1172 = vmatprep.subr.mxu0 0.0
        %1173 = vmatpush1.msra.mxu0 0.0
        %1174 = vmatprep.subr.mxu0 0.0
        %1175 = vmatpush1.msra.mxu0 %v1139
        %1176 = vmatprep.subr.mxu0 0.0
        %1177 = vmatpush2.msra.mxu0 0.0
        %1178 = vmatprep.subr.mxu0 0.0
        %1179 = vmatpush2.msra.mxu0 0.0
        %1180 = vmatprep.subr.mxu0 0.0
        %1181 = vmatpush2.msra.mxu0 0.0
        %1182 = vmatprep.subr.mxu0 0.0
        %1183 = vmatpush2.msra.mxu0 0.0
        %1184 = vmatprep.subr.mxu0 0.0
        %1185 = vmatpush2.msra.mxu0 0.0
        %1186 = vmatprep.subr.mxu0 0.0
        %1187 = vmatpush2.msra.mxu0 0.0
        %1188 = vmatprep.subr.mxu0 0.0
        %1189 = vmatpush2.msra.mxu0 0.0
        %1190 = vmatprep.subr.mxu0 0.0
        %1191 = vmatpush2.msra.mxu0 0.0
        %1192 = vmatprep.subr.mxu0 0.0
        %1193 = vmatpush2.msra.mxu0 0.0
        %1194 = vmatprep.subr.mxu0 0.0
        %1195 = vmatpush2.msra.mxu0 0.0
        %1196 = vmatprep.subr.mxu0 0.0
        %1197 = vmatpush2.msra.mxu0 0.0
        %1198 = vmatprep.subr.mxu0 0.0
        %1199 = vmatpush2.msra.mxu0 0.0
        %1200 = vmatprep.subr.mxu0 0.0
        %1201 = vmatpush2.msra.mxu0 0.0
        %1202 = vmatprep.subr.mxu0 0.0
        %1203 = vmatpush2.msra.mxu0 0.0
        %1204 = vmatprep.subr.mxu0 0.0
        %1205 = vmatpush2.msra.mxu0 0.0
        %1206 = vmatprep.subr.mxu0 0.0
        %1207 = vmatpush2.msra.mxu0 0.0
        %1208 = vmatprep.mubr.f32.mxu0 0.0
        %1209 = vmatmul.mubr.f32.gmra.mxu0 %v1142
        %v1210 = vpop.f32.mrf.mxu0
        %v1211 = vadd.f32 0.0, %v1210
        %v1212 = vpop.f32.mrf.mxu0
        %1213 = vdwg.mxu0
        %v1214 = vld [vmem:[%s5 + $0x10] sm:$0xff]
        %v1216 = vsel %vm561, %v1211, 0
        %1218 = vmatprep.subr.mxu0 0.0
        %1219 = vmatpush1.msra.mxu0 0.0
        %1220 = vmatprep.subr.mxu0 0.0
        %1221 = vmatpush1.msra.mxu0 0.0
        %1222 = vmatprep.subr.mxu0 0.0
        %1223 = vmatpush1.msra.mxu0 0.0
        %1224 = vmatprep.subr.mxu0 0.0
        %1225 = vmatpush1.msra.mxu0 0.0
        %1226 = vmatprep.subr.mxu0 0.0
        %1227 = vmatpush1.msra.mxu0 0.0
        %1228 = vmatprep.subr.mxu0 0.0
        %1229 = vmatpush1.msra.mxu0 0.0
        %1230 = vmatprep.subr.mxu0 0.0
        %1231 = vmatpush1.msra.mxu0 0.0
        %1232 = vmatprep.subr.mxu0 0.0
        %1233 = vmatpush1.msra.mxu0 0.0
        %1234 = vmatprep.subr.mxu0 0.0
        %1235 = vmatpush1.msra.mxu0 0.0
        %1236 = vmatprep.subr.mxu0 0.0
        %1237 = vmatpush1.msra.mxu0 0.0
        %1238 = vmatprep.subr.mxu0 0.0
        %1239 = vmatpush1.msra.mxu0 0.0
        %1240 = vmatprep.subr.mxu0 0.0
        %1241 = vmatpush1.msra.mxu0 0.0
        %1242 = vmatprep.subr.mxu0 0.0
        %1243 = vmatpush1.msra.mxu0 0.0
        %1244 = vmatprep.subr.mxu0 0.0
        %1245 = vmatpush1.msra.mxu0 0.0
        %1246 = vmatprep.subr.mxu0 0.0
        %1247 = vmatpush1.msra.mxu0 0.0
        %1248 = vmatprep.subr.mxu0 0.0
        %1249 = vmatpush1.msra.mxu0 %v1214
        %1250 = vmatprep.subr.mxu0 0.0
        %1251 = vmatpush2.msra.mxu0 0.0
        %1252 = vmatprep.subr.mxu0 0.0
        %1253 = vmatpush2.msra.mxu0 0.0
        %1254 = vmatprep.subr.mxu0 0.0
        %1255 = vmatpush2.msra.mxu0 0.0
        %1256 = vmatprep.subr.mxu0 0.0
        %1257 = vmatpush2.msra.mxu0 0.0
        %1258 = vmatprep.subr.mxu0 0.0
        %1259 = vmatpush2.msra.mxu0 0.0
        %1260 = vmatprep.subr.mxu0 0.0
        %1261 = vmatpush2.msra.mxu0 0.0
        %1262 = vmatprep.subr.mxu0 0.0
        %1263 = vmatpush2.msra.mxu0 0.0
        %1264 = vmatprep.subr.mxu0 0.0
        %1265 = vmatpush2.msra.mxu0 0.0
        %1266 = vmatprep.subr.mxu0 0.0
        %1267 = vmatpush2.msra.mxu0 0.0
        %1268 = vmatprep.subr.mxu0 0.0
        %1269 = vmatpush2.msra.mxu0 0.0
        %1270 = vmatprep.subr.mxu0 0.0
        %1271 = vmatpush2.msra.mxu0 0.0
        %1272 = vmatprep.subr.mxu0 0.0
        %1273 = vmatpush2.msra.mxu0 0.0
        %1274 = vmatprep.subr.mxu0 0.0
        %1275 = vmatpush2.msra.mxu0 0.0
        %1276 = vmatprep.subr.mxu0 0.0
        %1277 = vmatpush2.msra.mxu0 0.0
        %1278 = vmatprep.subr.mxu0 0.0
        %1279 = vmatpush2.msra.mxu0 0.0
        %1280 = vmatprep.subr.mxu0 0.0
        %1281 = vmatpush2.msra.mxu0 0.0
        %1282 = vmatprep.mubr.f32.mxu0 0.0
        %1283 = vmatmul.mubr.f32.gmra.mxu0 %v1216
        %v1284 = vpop.f32.mrf.mxu0
        %v1285 = vadd.f32 0.0, %v1284
        %v1286 = vpop.f32.mrf.mxu0
        %1287 = vdwg.mxu0
        %v1288 = vadd.f32 %v1043, %v1285
        %s1289 = scalar_lea.vmem %s6, 24
        %v1290 = vld [vmem:[%s1289] sm:$0xff]
        %1291 = vrot.lane.b32.xlu0 %v408, 104
        %v1292 = vpop.permute.xlu0 %1291
        %1293 = vrot.lane.b32.xlu0 %v482, 104
        %v1294 = vpop.permute.xlu0 %1293
        %v1295 = vsel %vm561, %v1292, 0
        %v1297 = vsel %vm561, %v1294, 0
        %1299 = vmatprep.subr.mxu0 0.0
        %1300 = vmatpush1.xpose.msra.mxu0 0.0
        %1301 = vmatprep.subr.mxu0 0.0
        %1302 = vmatpush1.xpose.msra.mxu0 0.0
        %1303 = vmatprep.subr.mxu0 0.0
        %1304 = vmatpush1.xpose.msra.mxu0 0.0
        %1305 = vmatprep.subr.mxu0 0.0
        %1306 = vmatpush1.xpose.msra.mxu0 0.0
        %1307 = vmatprep.subr.mxu0 0.0
        %1308 = vmatpush1.xpose.msra.mxu0 0.0
        %1309 = vmatprep.subr.mxu0 0.0
        %1310 = vmatpush1.xpose.msra.mxu0 0.0
        %1311 = vmatprep.subr.mxu0 0.0
        %1312 = vmatpush1.xpose.msra.mxu0 0.0
        %1313 = vmatprep.subr.mxu0 0.0
        %1314 = vmatpush1.xpose.msra.mxu0 0.0
        %1315 = vmatprep.subr.mxu0 0.0
        %1316 = vmatpush1.xpose.msra.mxu0 0.0
        %1317 = vmatprep.subr.mxu0 0.0
        %1318 = vmatpush1.xpose.msra.mxu0 0.0
        %1319 = vmatprep.subr.mxu0 0.0
        %1320 = vmatpush1.xpose.msra.mxu0 0.0
        %1321 = vmatprep.subr.mxu0 0.0
        %1322 = vmatpush1.xpose.msra.mxu0 0.0
        %1323 = vmatprep.subr.mxu0 0.0
        %1324 = vmatpush1.xpose.msra.mxu0 0.0
        %1325 = vmatprep.subr.mxu0 0.0
        %1326 = vmatpush1.xpose.msra.mxu0 0.0
        %1327 = vmatprep.subr.mxu0 0.0
        %1328 = vmatpush1.xpose.msra.mxu0 0.0
        %1329 = vmatprep.subr.mxu0 0.0
        %1330 = vmatpush1.xpose.msra.mxu0 %v1297
        %1331 = vmatprep.subr.mxu0 0.0
        %1332 = vmatpush2.xpose.msra.mxu0 0.0
        %1333 = vmatprep.subr.mxu0 0.0
        %1334 = vmatpush2.xpose.msra.mxu0 0.0
        %1335 = vmatprep.subr.mxu0 0.0
        %1336 = vmatpush2.xpose.msra.mxu0 0.0
        %1337 = vmatprep.subr.mxu0 0.0
        %1338 = vmatpush2.xpose.msra.mxu0 0.0
        %1339 = vmatprep.subr.mxu0 0.0
        %1340 = vmatpush2.xpose.msra.mxu0 0.0
        %1341 = vmatprep.subr.mxu0 0.0
        %1342 = vmatpush2.xpose.msra.mxu0 0.0
        %1343 = vmatprep.subr.mxu0 0.0
        %1344 = vmatpush2.xpose.msra.mxu0 0.0
        %1345 = vmatprep.subr.mxu0 0.0
        %1346 = vmatpush2.xpose.msra.mxu0 0.0
        %1347 = vmatprep.subr.mxu0 0.0
        %1348 = vmatpush2.xpose.msra.mxu0 0.0
        %1349 = vmatprep.subr.mxu0 0.0
        %1350 = vmatpush2.xpose.msra.mxu0 0.0
        %1351 = vmatprep.subr.mxu0 0.0
        %1352 = vmatpush2.xpose.msra.mxu0 0.0
        %1353 = vmatprep.subr.mxu0 0.0
        %1354 = vmatpush2.xpose.msra.mxu0 0.0
        %1355 = vmatprep.subr.mxu0 0.0
        %1356 = vmatpush2.xpose.msra.mxu0 0.0
        %1357 = vmatprep.subr.mxu0 0.0
        %1358 = vmatpush2.xpose.msra.mxu0 0.0
        %1359 = vmatprep.subr.mxu0 0.0
        %1360 = vmatpush2.xpose.msra.mxu0 0.0
        %1361 = vmatprep.subr.mxu0 0.0
        %1362 = vmatpush2.xpose.msra.mxu0 0.0
        %1363 = vmatprep.mubr.f32.mxu0 0.0
        %1364 = vmatmul.mubr.f32.gmra.mxu0 %v1295
        %v1365 = vpop.f32.mrf.mxu0
        %v1366 = vadd.f32 %v1290, %v1365
        %v1367 = vpop.f32.mrf.mxu0
        %1368 = vdwg.mxu0
        %v1369 = vadd.f32 %v1366, %v642
        %v1370 = vsel %vm561, %v1369, -inf
        %1371 = vmax.xlane.f32.xlu0 %v1370
        %v1372 = vpop.xlane.xlu0 %1371
        %v1373 = vsub.f32 %v1369, %v1372
        %v1374 = vmul.f32 %v1373, 1.442695
        %v1375 = vpow.pop %v1374
        %v1376 = vsel %vm561, %v1375, 0.0
        %1377 = vadd.xlane.f32.xlu0 %v1376
        %v1378 = vpop.xlane.xlu0 %1377
        %v1379 = vrcp.pop %v1378
        %v1380 = vmul.f32 %v1375, %v1379
        %1381 = vrot.lane.b32.xlu0 %v556, 104
        %v1382 = vpop.permute.xlu0 %1381
        %v1385 = vsel %vm561, %v1380, 0
        %1387 = vmatprep.subr.mxu0 0.0
        %1388 = vmatpush1.msra.mxu0 0.0
        %1389 = vmatprep.subr.mxu0 0.0
        %1390 = vmatpush1.msra.mxu0 0.0
        %1391 = vmatprep.subr.mxu0 0.0
        %1392 = vmatpush1.msra.mxu0 0.0
        %1393 = vmatprep.subr.mxu0 0.0
        %1394 = vmatpush1.msra.mxu0 0.0
        %1395 = vmatprep.subr.mxu0 0.0
        %1396 = vmatpush1.msra.mxu0 0.0
        %1397 = vmatprep.subr.mxu0 0.0
        %1398 = vmatpush1.msra.mxu0 0.0
        %1399 = vmatprep.subr.mxu0 0.0
        %1400 = vmatpush1.msra.mxu0 0.0
        %1401 = vmatprep.subr.mxu0 0.0
        %1402 = vmatpush1.msra.mxu0 0.0
        %1403 = vmatprep.subr.mxu0 0.0
        %1404 = vmatpush1.msra.mxu0 0.0
        %1405 = vmatprep.subr.mxu0 0.0
        %1406 = vmatpush1.msra.mxu0 0.0
        %1407 = vmatprep.subr.mxu0 0.0
        %1408 = vmatpush1.msra.mxu0 0.0
        %1409 = vmatprep.subr.mxu0 0.0
        %1410 = vmatpush1.msra.mxu0 0.0
        %1411 = vmatprep.subr.mxu0 0.0
        %1412 = vmatpush1.msra.mxu0 0.0
        %1413 = vmatprep.subr.mxu0 0.0
        %1414 = vmatpush1.msra.mxu0 0.0
        %1415 = vmatprep.subr.mxu0 0.0
        %1416 = vmatpush1.msra.mxu0 0.0
        %1417 = vmatprep.subr.mxu0 0.0
        %1418 = vmatpush1.msra.mxu0 %v1382
        %1419 = vmatprep.subr.mxu0 0.0
        %1420 = vmatpush2.msra.mxu0 0.0
        %1421 = vmatprep.subr.mxu0 0.0
        %1422 = vmatpush2.msra.mxu0 0.0
        %1423 = vmatprep.subr.mxu0 0.0
        %1424 = vmatpush2.msra.mxu0 0.0
        %1425 = vmatprep.subr.mxu0 0.0
        %1426 = vmatpush2.msra.mxu0 0.0
        %1427 = vmatprep.subr.mxu0 0.0
        %1428 = vmatpush2.msra.mxu0 0.0
        %1429 = vmatprep.subr.mxu0 0.0
        %1430 = vmatpush2.msra.mxu0 0.0
        %1431 = vmatprep.subr.mxu0 0.0
        %1432 = vmatpush2.msra.mxu0 0.0
        %1433 = vmatprep.subr.mxu0 0.0
        %1434 = vmatpush2.msra.mxu0 0.0
        %1435 = vmatprep.subr.mxu0 0.0
        %1436 = vmatpush2.msra.mxu0 0.0
        %1437 = vmatprep.subr.mxu0 0.0
        %1438 = vmatpush2.msra.mxu0 0.0
        %1439 = vmatprep.subr.mxu0 0.0
        %1440 = vmatpush2.msra.mxu0 0.0
        %1441 = vmatprep.subr.mxu0 0.0
        %1442 = vmatpush2.msra.mxu0 0.0
        %1443 = vmatprep.subr.mxu0 0.0
        %1444 = vmatpush2.msra.mxu0 0.0
        %1445 = vmatprep.subr.mxu0 0.0
        %1446 = vmatpush2.msra.mxu0 0.0
        %1447 = vmatprep.subr.mxu0 0.0
        %1448 = vmatpush2.msra.mxu0 0.0
        %1449 = vmatprep.subr.mxu0 0.0
        %1450 = vmatpush2.msra.mxu0 0.0
        %1451 = vmatprep.mubr.f32.mxu0 0.0
        %1452 = vmatmul.mubr.f32.gmra.mxu0 %v1385
        %v1453 = vpop.f32.mrf.mxu0
        %v1454 = vadd.f32 0.0, %v1453
        %v1455 = vpop.f32.mrf.mxu0
        %1456 = vdwg.mxu0
        %v1457 = vld [vmem:[%s5 + $0x18] sm:$0xff]
        %v1459 = vsel %vm561, %v1454, 0
        %1461 = vmatprep.subr.mxu0 0.0
        %1462 = vmatpush1.msra.mxu0 0.0
        %1463 = vmatprep.subr.mxu0 0.0
        %1464 = vmatpush1.msra.mxu0 0.0
        %1465 = vmatprep.subr.mxu0 0.0
        %1466 = vmatpush1.msra.mxu0 0.0
        %1467 = vmatprep.subr.mxu0 0.0
        %1468 = vmatpush1.msra.mxu0 0.0
        %1469 = vmatprep.subr.mxu0 0.0
        %1470 = vmatpush1.msra.mxu0 0.0
        %1471 = vmatprep.subr.mxu0 0.0
        %1472 = vmatpush1.msra.mxu0 0.0
        %1473 = vmatprep.subr.mxu0 0.0
        %1474 = vmatpush1.msra.mxu0 0.0
        %1475 = vmatprep.subr.mxu0 0.0
        %1476 = vmatpush1.msra.mxu0 0.0
        %1477 = vmatprep.subr.mxu0 0.0
        %1478 = vmatpush1.msra.mxu0 0.0
        %1479 = vmatprep.subr.mxu0 0.0
        %1480 = vmatpush1.msra.mxu0 0.0
        %1481 = vmatprep.subr.mxu0 0.0
        %1482 = vmatpush1.msra.mxu0 0.0
        %1483 = vmatprep.subr.mxu0 0.0
        %1484 = vmatpush1.msra.mxu0 0.0
        %1485 = vmatprep.subr.mxu0 0.0
        %1486 = vmatpush1.msra.mxu0 0.0
        %1487 = vmatprep.subr.mxu0 0.0
        %1488 = vmatpush1.msra.mxu0 0.0
        %1489 = vmatprep.subr.mxu0 0.0
        %1490 = vmatpush1.msra.mxu0 0.0
        %1491 = vmatprep.subr.mxu0 0.0
        %1492 = vmatpush1.msra.mxu0 %v1457
        %1493 = vmatprep.subr.mxu0 0.0
        %1494 = vmatpush2.msra.mxu0 0.0
        %1495 = vmatprep.subr.mxu0 0.0
        %1496 = vmatpush2.msra.mxu0 0.0
        %1497 = vmatprep.subr.mxu0 0.0
        %1498 = vmatpush2.msra.mxu0 0.0
        %1499 = vmatprep.subr.mxu0 0.0
        %1500 = vmatpush2.msra.mxu0 0.0
        %1501 = vmatprep.subr.mxu0 0.0
        %1502 = vmatpush2.msra.mxu0 0.0
        %1503 = vmatprep.subr.mxu0 0.0
        %1504 = vmatpush2.msra.mxu0 0.0
        %1505 = vmatprep.subr.mxu0 0.0
        %1506 = vmatpush2.msra.mxu0 0.0
        %1507 = vmatprep.subr.mxu0 0.0
        %1508 = vmatpush2.msra.mxu0 0.0
        %1509 = vmatprep.subr.mxu0 0.0
        %1510 = vmatpush2.msra.mxu0 0.0
        %1511 = vmatprep.subr.mxu0 0.0
        %1512 = vmatpush2.msra.mxu0 0.0
        %1513 = vmatprep.subr.mxu0 0.0
        %1514 = vmatpush2.msra.mxu0 0.0
        %1515 = vmatprep.subr.mxu0 0.0
        %1516 = vmatpush2.msra.mxu0 0.0
        %1517 = vmatprep.subr.mxu0 0.0
        %1518 = vmatpush2.msra.mxu0 0.0
        %1519 = vmatprep.subr.mxu0 0.0
        %1520 = vmatpush2.msra.mxu0 0.0
        %1521 = vmatprep.subr.mxu0 0.0
        %1522 = vmatpush2.msra.mxu0 0.0
        %1523 = vmatprep.subr.mxu0 0.0
        %1524 = vmatpush2.msra.mxu0 0.0
        %1525 = vmatprep.mubr.f32.mxu0 0.0
        %1526 = vmatmul.mubr.f32.gmra.mxu0 %v1459
        %v1527 = vpop.f32.mrf.mxu0
        %v1528 = vadd.f32 0.0, %v1527
        %v1529 = vpop.f32.mrf.mxu0
        %1530 = vdwg.mxu0
        %v1531 = vadd.f32 %v1288, %v1528
        %v1532 = vadd.f32 %v315, %v1531
        %1533 = vst.msk [vmem:[%s307] sm:$0xff] %vm317, %v1532
        %s1534 = sand.u32 %s208, 1
        %s1535 = scalar_lea.sflag [#allocation3], %s1534
        %s1536 = sand.u32 %s208, 1
        %s1537 = smul.addr %s1536, 8
        %s1538 = scalar_lea.vmem [#allocation2], %s1537
        // Predicated region
        $region53: #{nash_t5_layer_self_attention.1} parent=51 // pred_check
          %p1539 = pneg %p218
        $region54: #{nash_t5_layer_self_attention.1} parent=51 // pred_check_branch
          %1541 = sbr.rel (%p1539) target = $region56
        $region55: #{nash_t5_layer_self_attention.1} parent=51 // pred_region
          %s1543 = ssub.s32 128, 128
          %1544 = vsyncadd %s1535, %s1543
          %s1545 = smul.addr %s22, 128
          %s1546 = scalar_lea.hbm %s8, %s1545
          %s1548 = sshll.u32 %s1538, 4
          %s1549 = int_to_ptr.vmem [resolvable:$true] %s1548
          %1551 = dma.vmem_to_hbm [thread:$0]  %s1549, 128, %s1546, %s1535
        $region56: #{nash_t5_layer_self_attention.1} parent=51 // pred_fallthru
          _
      $region52: #{nash_t5_layer_self_attention.1} parent=5 // pred_fallthru
        _
      %p1552 = scmp.le.s32.totalorder 2, %s17
      // Predicated region
      $region57: #{nash_t5_layer_self_attention.1} parent=5 // pred_check
        %p1553 = pneg %p1552
      $region58: #{nash_t5_layer_self_attention.1} parent=5 // pred_check_branch
        %1555 = sbr.rel (%p1553) target = $region60
      $region59: #{nash_t5_layer_self_attention.1} parent=5 // pred_region
        %s1556 = ssub.s32 %s17, 2
        // Predicated region
        $region61: #{nash_t5_layer_self_attention.1} parent=59 // pred_check
          %p1557 = pneg %p224
        $region62: #{nash_t5_layer_self_attention.1} parent=59 // pred_check_branch
          %1559 = sbr.rel (%p1557) target = $region64
        $region63: #{nash_t5_layer_self_attention.1} parent=59 // pred_region
          %s1560 = sand.u32 %s209, 1
          %s1561 = scalar_lea.sflag [#allocation3], %s1560
          %s1562 = sand.u32 %s209, 1
          %s1563 = smul.addr %s1562, 8
          %s1564 = scalar_lea.vmem [#allocation2], %s1563
          %1565 = dma.done %s1561, 128
        $region64: #{nash_t5_layer_self_attention.1} parent=59 // pred_fallthru
          _
      $region60: #{nash_t5_layer_self_attention.1} parent=5 // pred_fallthru
        _
    $region6: #{nash_t5_layer_self_attention.1} parent=1 // loop_footer
      %s21 = sadd.s32 1, %s17
    $region7: #{nash_t5_layer_self_attention.1} parent=1 // loop_footer_branch
      %16 = sbr.rel target = $region3
    $region8: #{nash_t5_layer_self_attention.1} parent=1 // loop_exit
      _
    %1566 = vsyncpa [#allocation3], 1
    %s1567 = scalar_lea.sflag [#allocation3], 1
    %1568 = vsyncpa %s1567, 1

</llo_original>
